<compile_context>
chip_gen: v7x
topology: tpu7x:2x2x1
jax: 0.10.0
libtpu: 0.0.40
codegen_flags: <defaults>
</compile_context>

<pallas_src>
import jax
import jax.numpy as jnp
import numpy as np
from jax.experimental import pallas as pl
from jax.experimental.pallas import tpu as pltpu

N_GRAPHEME = 168
N_VOWEL = 11
N_CONSONANT = 7
N_FUSED = N_GRAPHEME + N_VOWEL + N_CONSONANT   # 186
N_FUSED_PAD = 256                              # pad fused head to a lane-dense width
IN_FEATURES = 2048
GEM_EPS = 1e-6


def _gem_heads_kernel(p_ref, f_ref, w_ref, b_ref, o_ref):
    """One grid step == TB batch samples.

    p_ref : (1, 1)  f32 in SMEM      GeM p parameter (learnable, init 3.0)
    f_ref : (TB, HW, 2048)           backbone feature map block, channels on lanes
    w_ref : (2048, 256)              fused head weights [Wg^T | Wv^T | Wc^T | 0-pad]
    b_ref : (1, 256)                 fused head biases (zero in the pad columns)
    o_ref : (TB, 256)                fused logits for this block
    """
    p = p_ref[0, 0]                                    # scalar read from SMEM
    f = f_ref[...].astype(jnp.float32)                 # (TB, HW, C), f32 math

    # gem(x): avg_pool2d(x.clamp(min=eps).pow(p), (H, W)).pow(1/p)
    f = jnp.maximum(f, GEM_EPS)                        # clamp(min=eps) -> strictly positive
    fp = jnp.exp(p * jnp.log(f))                       # x.pow(p) with runtime float p
    pooled = jnp.mean(fp, axis=1)                      # full-spatial average pool -> (TB, C)
    pooled = jnp.exp(jnp.log(pooled) * (1.0 / p))      # .pow(1/p)

    # F.dropout(x, 0.25, training=False) -> identity in eval mode.
    # TODO(synk): training-mode dropout (pltpu.prng_* mask + 1/(1-p) scale) not emitted here.

    # Single fused head matmul on the MXU (all three heads at once, lane-dense output).
    o_ref[...] = (
        jnp.dot(pooled, w_ref[...], preferred_element_type=jnp.float32) + b_ref[...]
    )


def gem_and_heads(feats_bhwc, params, *, block_b=8):
    """feats_bhwc: (B, hf, wf, 2048) channels-last float32/bfloat16.

    Returns (logit_grapheme, logit_vowel, logit_consonant).
    """
    B, hf, wf, C = feats_bhwc.shape
    assert C == IN_FEATURES
    HW = hf * wf

    # Samples per grid step. Keep TB == B for tiny batches so blocks cover full dims.
    TB = B if B < block_b else block_b
    n_blocks = -(-B // TB)
    Bp = n_blocks * TB

    # Channels-last -> (B, HW, C): a free reshape, no HBM transpose.
    feats_flat = feats_bhwc.reshape(B, HW, C)
    if Bp != B:
        feats_flat = jnp.pad(feats_flat, ((0, Bp - B), (0, 0), (0, 0)))

    # VMEM budget: double-buffered feats block + weights/bias/output (+ margin),
    # clamped to stay within v7x's 64 MiB physical VMEM.
    itemsize = jnp.dtype(feats_flat.dtype).itemsize
    est = (2 * TB * HW * C * itemsize
           + 2 * (C * N_FUSED_PAD * 4 + N_FUSED_PAD * 4)
           + 2 * TB * N_FUSED_PAD * 4
           + (4 << 20))
    vmem_limit = int(min(max(est, 16 << 20), 48 << 20))

    grid_spec = pltpu.PrefetchScalarGridSpec(
        num_scalar_prefetch=0,
        grid=(n_blocks,),
        in_specs=[
            pl.BlockSpec(memory_space=pltpu.MemorySpace.SMEM),           # p (scalar)
            pl.BlockSpec((TB, HW, C), lambda b: (b, 0, 0)),              # feats block
            pl.BlockSpec((IN_FEATURES, N_FUSED_PAD), lambda b: (0, 0)),  # fused W^T
            pl.BlockSpec((1, N_FUSED_PAD), lambda b: (0, 0)),            # fused bias
        ],
        out_specs=pl.BlockSpec((TB, N_FUSED_PAD), lambda b: (b, 0)),
    )

    logits = pl.pallas_call(
        _gem_heads_kernel,
        grid_spec=grid_spec,
        out_shape=jax.ShapeDtypeStruct((Bp, N_FUSED_PAD), jnp.float32),
        compiler_params=pltpu.CompilerParams(
            dimension_semantics=("parallel",),        # disjoint output rows -> legal
            vmem_limit_bytes=vmem_limit,
        ),
    )(params["p"], feats_flat, params["w_fused"], params["b_fused"])

    lg = logits[:B, :N_GRAPHEME]
    lv = logits[:B, N_GRAPHEME:N_GRAPHEME + N_VOWEL]
    lc = logits[:B, N_GRAPHEME + N_VOWEL:N_FUSED]
    return lg, lv, lc


def classifier_cnn_forward(x, feats_bhwc, params):
    """ClassifierCNN.forward.

    x          : (B, 1, H, W)  NCHW greyscale image (as in the PyTorch module)
    feats_bhwc : (B, hf, wf, 2048) channels-last stand-in for self.model.features(cat([x,x,x],1))
    """
    x3 = jnp.concatenate([x, x, x], axis=1)  # torch.cat([x, x, x], dim=1) -> (B, 3, H, W)
    # TODO(synk): self.model.features (pretrainedmodels SEResNeXt-50 / mish backbone) has no
    # clean Pallas equivalent; `feats_bhwc` is a deterministic stand-in for its output,
    # produced channels-last (as a TPU backbone would) so no HBM transpose is needed here.
    del x3
    return gem_and_heads(feats_bhwc, params)


def _make_params(key):
    """Deterministic parameter init matching the PyTorch module's shapes (heads fused)."""
    kg_w, kg_b, kv_w, kv_b, kc_w, kc_b = jax.random.split(key, 6)
    bound = 1.0 / np.sqrt(IN_FEATURES)

    def lin(kw, kb, n_out):
        w = jax.random.uniform(kw, (n_out, IN_FEATURES), jnp.float32, -bound, bound)
        b = jax.random.uniform(kb, (n_out,), jnp.float32, -bound, bound)
        return w, b

    wg, bg = lin(kg_w, kg_b, N_GRAPHEME)
    wv, bv = lin(kv_w, kv_b, N_VOWEL)
    wc, bc = lin(kc_w, kc_b, N_CONSONANT)

    # Fuse the three heads: [Wg^T | Wv^T | Wc^T] -> (2048, 186), zero-pad to 256 lanes.
    w_fused = jnp.concatenate([wg.T, wv.T, wc.T], axis=1)
    b_fused = jnp.concatenate([bg, bv, bc])[None, :]
    pad = N_FUSED_PAD - N_FUSED
    w_fused = jnp.pad(w_fused, ((0, 0), (0, pad)))
    b_fused = jnp.pad(b_fused, ((0, 0), (0, pad)))

    return {
        "p": jnp.full((1, 1), 3.0, jnp.float32),   # GeM.p = Parameter(ones(1) * 3)
        "w_fused": w_fused,
        "b_fused": b_fused,
    }


def _reference(feats_bhwc, params):
    """Pure-JAX reference for the Pallas-implemented path (GeM + fused heads, eval dropout)."""
    p = params["p"][0, 0]
    f = jnp.maximum(feats_bhwc.astype(jnp.float32), GEM_EPS)
    fp = f ** p
    pooled = jnp.mean(fp, axis=(1, 2)) ** (1.0 / p)          # (B, 2048)
    logits = pooled @ params["w_fused"] + params["b_fused"][0]
    return (logits[:, :N_GRAPHEME],
            logits[:, N_GRAPHEME:N_GRAPHEME + N_VOWEL],
            logits[:, N_GRAPHEME + N_VOWEL:N_FUSED])


if __name__ == "__main__":
    key = jax.random.PRNGKey(0)
    k_x, k_f, k_p = jax.random.split(key, 3)

    B, H, W = 2, 16, 16
    hf, wf = 4, 4
    x = jax.random.normal(k_x, (B, 1, H, W), jnp.float32)
    # Deterministic channels-last stand-in for the backbone feature map, streamed as bf16
    # (cast once at the backbone boundary; all in-kernel math stays f32).
    feats = jax.random.normal(k_f, (B, hf, wf, IN_FEATURES), jnp.float32).astype(jnp.bfloat16)
    params = _make_params(k_p)

    out = classifier_cnn_forward(x, feats, params)
    out = jax.block_until_ready(out)

    ref = _reference(feats, params)
    for o, r in zip(out, ref):
        np.testing.assert_allclose(np.asarray(o), np.asarray(r), rtol=1e-3, atol=1e-3)

    print("KERNEL_OK")
</pallas_src>

<mosaic_0001>
module attributes {stable_mosaic.version = 11 : i64} {
  func.func @_gem_heads_kernel(%arg0: i32, %arg1: memref<1x1xf32, #tpu.memory_space<smem>>, %arg2: memref<2x16x2048xbf16, #tpu.memory_space<vmem>>, %arg3: memref<2048x256xf32, #tpu.memory_space<vmem>>, %arg4: memref<1x256xf32, #tpu.memory_space<vmem>>, %arg5: memref<2x256xf32, #tpu.memory_space<vmem>>) attributes {dimension_semantics = [#tpu.dimension_semantics<parallel>], iteration_bounds = array<i64: 1>, scalar_prefetch = 0 : i64, scratch_operands = 0 : i64, tpu.core_type = #tpu.core_type<tc>, window_params = [{transform_indices = @transform_0, window_bounds = array<i64: 1, 1>}, {transform_indices = @transform_1, window_bounds = array<i64: 2, 16, 2048>}, {pipeline_mode = #tpu.pipeline_mode<synchronous>, transform_indices = @transform_2, window_bounds = array<i64: 2048, 256>}, {pipeline_mode = #tpu.pipeline_mode<synchronous>, transform_indices = @transform_3, window_bounds = array<i64: 1, 256>}, {transform_indices = @transform_4, window_bounds = array<i64: 2, 256>}]} {
    %c0 = arith.constant 0 : index
    %c0_0 = arith.constant 0 : index
    %0 = memref.load %arg1[%c0, %c0_0] : memref<1x1xf32, #tpu.memory_space<smem>>
    %c0_1 = arith.constant 0 : index
    %c0_2 = arith.constant 0 : index
    %c0_3 = arith.constant 0 : index
    %1 = vector.load %arg2[%c0_1, %c0_2, %c0_3] : memref<2x16x2048xbf16, #tpu.memory_space<vmem>>, vector<2x16x2048xbf16>
    %2 = arith.extf %1 : vector<2x16x2048xbf16> to vector<2x16x2048xf32>
    %cst = arith.constant 9.99999997E-7 : f32
    %3 = vector.broadcast %cst : f32 to vector<2x16x2048xf32>
    %4 = arith.maximumf %2, %3 : vector<2x16x2048xf32>
    %5 = math.log %4 : vector<2x16x2048xf32>
    %6 = vector.broadcast %0 : f32 to vector<2x16x2048xf32>
    %7 = arith.mulf %6, %5 : vector<2x16x2048xf32>
    %8 = math.exp %7 : vector<2x16x2048xf32>
    %cst_4 = arith.constant dense<0.000000e+00> : vector<2x2048xf32>
    %9 = vector.multi_reduction <add>, %8, %cst_4 [1] : vector<2x16x2048xf32> to vector<2x2048xf32>
    %cst_5 = arith.constant 1.600000e+01 : f32
    %10 = vector.broadcast %cst_5 : f32 to vector<2x2048xf32>
    %11 = arith.divf %9, %10 : vector<2x2048xf32>
    %12 = math.log %11 : vector<2x2048xf32>
    %cst_6 = arith.constant 1.000000e+00 : f32
    %13 = arith.divf %cst_6, %0 : f32
    %14 = vector.broadcast %13 : f32 to vector<2x2048xf32>
    %15 = arith.mulf %12, %14 : vector<2x2048xf32>
    %16 = math.exp %15 : vector<2x2048xf32>
    %c0_7 = arith.constant 0 : index
    %c0_8 = arith.constant 0 : index
    %17 = vector.load %arg3[%c0_7, %c0_8] : memref<2048x256xf32, #tpu.memory_space<vmem>>, vector<2048x256xf32>
    %cst_9 = arith.constant dense<0.000000e+00> : vector<2x256xf32>
    %18 = tpu.matmul %16, %17, %cst_9 {dimension_numbers = #tpu.dot_dimension_numbers<[1], [0], [0], [1], [0, 0, 1, 1], [], []>} : vector<2x2048xf32>, vector<2048x256xf32>, vector<2x256xf32> -> vector<2x256xf32>
    %c0_10 = arith.constant 0 : index
    %c0_11 = arith.constant 0 : index
    %19 = vector.load %arg4[%c0_10, %c0_11] : memref<1x256xf32, #tpu.memory_space<vmem>>, vector<1x256xf32>
    %20 = vector.broadcast %19 : vector<1x256xf32> to vector<2x256xf32>
    %21 = arith.addf %18, %20 : vector<2x256xf32>
    %c0_12 = arith.constant 0 : index
    %c0_13 = arith.constant 0 : index
    %22 = vector.load %arg5[%c0_12, %c0_13] : memref<2x256xf32, #tpu.memory_space<vmem>>, vector<2x256xf32>
    tpu.vector_store %arg5[%c0_12, %c0_13], %21 {strides = array<i32>} : memref<2x256xf32, #tpu.memory_space<vmem>>, vector<2x256xf32>,
    return
  }
  func.func @transform_0(%arg0: i32) -> (i32, i32) {
    %c0_i32 = arith.constant 0 : i32
    %c0_i32_0 = arith.constant 0 : i32
    %c0_i32_1 = arith.constant 0 : i32
    return %c0_i32, %c0_i32_0 : i32, i32
  }
  func.func @transform_1(%arg0: i32) -> (i32, i32, i32) {
    %c0_i32 = arith.constant 0 : i32
    %c0_i32_0 = arith.constant 0 : i32
    %c0_i32_1 = arith.constant 0 : i32
    return %arg0, %c0_i32, %c0_i32_0 : i32, i32, i32
  }
  func.func @transform_2(%arg0: i32) -> (i32, i32) {
    %c0_i32 = arith.constant 0 : i32
    %c0_i32_0 = arith.constant 0 : i32
    %c0_i32_1 = arith.constant 0 : i32
    return %c0_i32, %c0_i32_0 : i32, i32
  }
  func.func @transform_3(%arg0: i32) -> (i32, i32) {
    %c0_i32 = arith.constant 0 : i32
    %c0_i32_0 = arith.constant 0 : i32
    %c0_i32_1 = arith.constant 0 : i32
    return %c0_i32, %c0_i32_0 : i32, i32
  }
  func.func @transform_4(%arg0: i32) -> (i32, i32) {
    %c0_i32 = arith.constant 0 : i32
    %c0_i32_0 = arith.constant 0 : i32
    return %arg0, %c0_i32 : i32, i32
  }
}

</mosaic_0001>

<llo_original>
// kernel: tpu_custom_call.1
$region0: #{tpu_custom_call.1}
  #allocation0 [shape = 'u32[]', space=smem, size = 0x4, offset = 0x4, fixed_abs, tag = 'smem constant byte address 0x4 - core index']
  #allocation1 [shape = 'u32[144,128]{1,0:T(1,128)}', space=vmem, size = 0x12000, scoped, tag = 'internal scratch']
  #allocation2 [shape = 'f32[1,1]{1,0:T(1,128)S(6)}', space=smem, size = 0x200, scoped, tag = 'scoped memory for tpu_custom_call.1']
  %s0 = inlined_call_operand.<no memory space> [shape: f32[1,1], index: 0, kind: input, shape index: {}]
  %s1 = inlined_call_operand.hbm [shape: bf16[2,16,2048], index: 1, kind: input, shape index: {}]
  %s2 = inlined_call_operand.hbm [shape: f32[2048,256], index: 2, kind: input, shape index: {}]
  %s3 = inlined_call_operand.hbm [shape: f32[1,256], index: 3, kind: input, shape index: {}]
  %s4 = inlined_call_operand.hbm [shape: f32[2,256], index: 4, kind: output, shape index: {}]
  %s5 = sld [smem:[#allocation0]]
  $region38: #{tpu_custom_call.1} parent=0
    _
  %s7 = ssub.s32 1, %s5
  %s8 = scalar_select 0, %s7, %s5
  %9 = sst [smem:[#allocation2]] %s0
  $region1: #{tpu_custom_call.1} parent=0
    #allocation3 [shape = 'u8[131072]{0}', space=vmem, size = 0x20000, scoped, tag = 'input window, operand 1, single buffered']
    #allocation4 [shape = 's32[1]{0}', space=sflag, size = 0x4, scoped, tag = 'scoped memory for tpu_custom_call.1']
    #allocation5 [shape = 's32[1]{0}', space=sflag, size = 0x4, scoped, tag = 'scoped memory for tpu_custom_call.1']
    #allocation6 [shape = 'u8[2097152]{0}', space=vmem, size = 0x200000, scoped, tag = 'input window, operand 2, single buffered']
    #allocation7 [shape = 's32[1]{0}', space=sflag, size = 0x4, scoped, tag = 'scoped memory for tpu_custom_call.1']
    #allocation8 [shape = 'u8[1024]{0}', space=vmem, size = 0x400, scoped, tag = 'input window, operand 3, single buffered']
    #allocation9 [shape = 'u8[2048]{0}', space=vmem, size = 0x800, scoped, tag = 'output window, operand 0, single buffered']
    %10 = vsyncpa [#allocation4], 0
    %11 = vsyncpa [#allocation7], 0
    %12 = vsyncpa [#allocation5], 0
    // Predicated region
    $region2: #{tpu_custom_call.1} parent=1 // pred_check
      _
    $region3: #{tpu_custom_call.1} parent=1 // pred_check_branch
      %14 = sbr.rel (0) target = $region5
    $region4: #{tpu_custom_call.1} parent=1 // pred_region
      _
    $region5: #{tpu_custom_call.1} parent=1 // pred_fallthru
      _
    // Predicated region
    $region6: #{tpu_custom_call.1} parent=1 // pred_check
      _
    $region7: #{tpu_custom_call.1} parent=1 // pred_check_branch
      %16 = sbr.rel (0) target = $region9
    $region8: #{tpu_custom_call.1} parent=1 // pred_region
      %s18 = ssub.s32 4096, 4096
      %19 = vsyncadd [#allocation4], %s18
      %s20 = sshll.u32 [#allocation3], 4
      %s21 = int_to_ptr.vmem [resolvable:$true] %s20
      %26 = dma.hbm_to_vmem [thread:$0]  %s1, 4096, %s21, [#allocation4], 1024, 1024, 64
    $region9: #{tpu_custom_call.1} parent=1 // pred_fallthru
      _
    // Predicated region
    $region10: #{tpu_custom_call.1} parent=1 // pred_check
      _
    $region11: #{tpu_custom_call.1} parent=1 // pred_check_branch
      %28 = sbr.rel (0) target = $region13
    $region12: #{tpu_custom_call.1} parent=1 // pred_region
      %s30 = ssub.s32 65536, 65536
      %31 = vsyncadd [#allocation7], %s30
      %s32 = sshll.u32 [#allocation6], 4
      %s33 = int_to_ptr.vmem [resolvable:$true] %s32
      %38 = dma.hbm_to_vmem [thread:$0]  %s2, 65536, %s33, [#allocation7], 256, 256, 16
    $region13: #{tpu_custom_call.1} parent=1 // pred_fallthru
      _
    // Predicated region
    $region14: #{tpu_custom_call.1} parent=1 // pred_check
      _
    $region15: #{tpu_custom_call.1} parent=1 // pred_check_branch
      %40 = sbr.rel (0) target = $region17
    $region16: #{tpu_custom_call.1} parent=1 // pred_region
      %s42 = ssub.s32 32, 32
      %43 = vsyncadd [#allocation7], %s42
      %s45 = sshll.u32 [#allocation8], 4
      %s46 = int_to_ptr.vmem [resolvable:$true] %s45
      %48 = dma.hbm_to_vmem [thread:$0]  %s3, 32, %s46, [#allocation7]
    $region17: #{tpu_custom_call.1} parent=1 // pred_fallthru
      _
    // Predicated region
    $region18: #{tpu_custom_call.1} parent=1 // pred_check
      _
    $region19: #{tpu_custom_call.1} parent=1 // pred_check_branch
      %50 = sbr.rel (0) target = $region21
    $region20: #{tpu_custom_call.1} parent=1 // pred_region
      %51 = dma.done [#allocation4], 4096
    $region21: #{tpu_custom_call.1} parent=1 // pred_fallthru
      _
    // Predicated region
    $region22: #{tpu_custom_call.1} parent=1 // pred_check
      _
    $region23: #{tpu_custom_call.1} parent=1 // pred_check_branch
      %53 = sbr.rel (0) target = $region25
    $region24: #{tpu_custom_call.1} parent=1 // pred_region
      %54 = dma.done [#allocation7], 65536
    $region25: #{tpu_custom_call.1} parent=1 // pred_fallthru
      _
    // Predicated region
    $region26: #{tpu_custom_call.1} parent=1 // pred_check
      _
    $region27: #{tpu_custom_call.1} parent=1 // pred_check_branch
      %56 = sbr.rel (0) target = $region29
    $region28: #{tpu_custom_call.1} parent=1 // pred_region
      %57 = dma.done [#allocation7], 32
    $region29: #{tpu_custom_call.1} parent=1 // pred_fallthru
      _
    %s58 = sld [smem:[#allocation2]]
    %v59 = vld [vmem:[#allocation3] sm:$0xff]
    %v60 = vld [vmem:[#allocation3 + $0x8] sm:$0xff]
    %v61 = vld [vmem:[#allocation3 + $0x10] sm:$0xff]
    %v62 = vld [vmem:[#allocation3 + $0x18] sm:$0xff]
    %v63 = vld [vmem:[#allocation3 + $0x20] sm:$0xff]
    %v64 = vld [vmem:[#allocation3 + $0x28] sm:$0xff]
    %v65 = vld [vmem:[#allocation3 + $0x30] sm:$0xff]
    %v66 = vld [vmem:[#allocation3 + $0x38] sm:$0xff]
    %v67 = vld [vmem:[#allocation3 + $0x40] sm:$0xff]
    %v68 = vld [vmem:[#allocation3 + $0x48] sm:$0xff]
    %v69 = vld [vmem:[#allocation3 + $0x50] sm:$0xff]
    %v70 = vld [vmem:[#allocation3 + $0x58] sm:$0xff]
    %v71 = vld [vmem:[#allocation3 + $0x60] sm:$0xff]
    %v72 = vld [vmem:[#allocation3 + $0x68] sm:$0xff]
    %v73 = vld [vmem:[#allocation3 + $0x70] sm:$0xff]
    %v74 = vld [vmem:[#allocation3 + $0x78] sm:$0xff]
    %v75 = vld [vmem:[#allocation3 + $0x80] sm:$0xff]
    %v76 = vld [vmem:[#allocation3 + $0x88] sm:$0xff]
    %v77 = vld [vmem:[#allocation3 + $0x90] sm:$0xff]
    %v78 = vld [vmem:[#allocation3 + $0x98] sm:$0xff]
    %v79 = vld [vmem:[#allocation3 + $0xa0] sm:$0xff]
    %v80 = vld [vmem:[#allocation3 + $0xa8] sm:$0xff]
    %v81 = vld [vmem:[#allocation3 + $0xb0] sm:$0xff]
    %v82 = vld [vmem:[#allocation3 + $0xb8] sm:$0xff]
    %v83 = vld [vmem:[#allocation3 + $0xc0] sm:$0xff]
    %v84 = vld [vmem:[#allocation3 + $0xc8] sm:$0xff]
    %v85 = vld [vmem:[#allocation3 + $0xd0] sm:$0xff]
    %v86 = vld [vmem:[#allocation3 + $0xd8] sm:$0xff]
    %v87 = vld [vmem:[#allocation3 + $0xe0] sm:$0xff]
    %v88 = vld [vmem:[#allocation3 + $0xe8] sm:$0xff]
    %v89 = vld [vmem:[#allocation3 + $0xf0] sm:$0xff]
    %v90 = vld [vmem:[#allocation3 + $0xf8] sm:$0xff]
    %v91 = vunpack.c.l.bf16 %v59
    %v92 = vunpack.c.h.bf16 %v59
    %v93 = vunpack.c.l.bf16 %v60
    %v94 = vunpack.c.h.bf16 %v60
    %v95 = vunpack.c.l.bf16 %v61
    %v96 = vunpack.c.h.bf16 %v61
    %v97 = vunpack.c.l.bf16 %v62
    %v98 = vunpack.c.h.bf16 %v62
    %v99 = vunpack.c.l.bf16 %v63
    %v100 = vunpack.c.h.bf16 %v63
    %v101 = vunpack.c.l.bf16 %v64
    %v102 = vunpack.c.h.bf16 %v64
    %v103 = vunpack.c.l.bf16 %v65
    %v104 = vunpack.c.h.bf16 %v65
    %v105 = vunpack.c.l.bf16 %v66
    %v106 = vunpack.c.h.bf16 %v66
    %v107 = vunpack.c.l.bf16 %v67
    %v108 = vunpack.c.h.bf16 %v67
    %v109 = vunpack.c.l.bf16 %v68
    %v110 = vunpack.c.h.bf16 %v68
    %v111 = vunpack.c.l.bf16 %v69
    %v112 = vunpack.c.h.bf16 %v69
    %v113 = vunpack.c.l.bf16 %v70
    %v114 = vunpack.c.h.bf16 %v70
    %v115 = vunpack.c.l.bf16 %v71
    %v116 = vunpack.c.h.bf16 %v71
    %v117 = vunpack.c.l.bf16 %v72
    %v118 = vunpack.c.h.bf16 %v72
    %v119 = vunpack.c.l.bf16 %v73
    %v120 = vunpack.c.h.bf16 %v73
    %v121 = vunpack.c.l.bf16 %v74
    %v122 = vunpack.c.h.bf16 %v74
    %v123 = vunpack.c.l.bf16 %v75
    %v124 = vunpack.c.h.bf16 %v75
    %v125 = vunpack.c.l.bf16 %v76
    %v126 = vunpack.c.h.bf16 %v76
    %v127 = vunpack.c.l.bf16 %v77
    %v128 = vunpack.c.h.bf16 %v77
    %v129 = vunpack.c.l.bf16 %v78
    %v130 = vunpack.c.h.bf16 %v78
    %v131 = vunpack.c.l.bf16 %v79
    %v132 = vunpack.c.h.bf16 %v79
    %v133 = vunpack.c.l.bf16 %v80
    %v134 = vunpack.c.h.bf16 %v80
    %v135 = vunpack.c.l.bf16 %v81
    %v136 = vunpack.c.h.bf16 %v81
    %v137 = vunpack.c.l.bf16 %v82
    %v138 = vunpack.c.h.bf16 %v82
    %v139 = vunpack.c.l.bf16 %v83
    %v140 = vunpack.c.h.bf16 %v83
    %v141 = vunpack.c.l.bf16 %v84
    %v142 = vunpack.c.h.bf16 %v84
    %v143 = vunpack.c.l.bf16 %v85
    %v144 = vunpack.c.h.bf16 %v85
    %v145 = vunpack.c.l.bf16 %v86
    %v146 = vunpack.c.h.bf16 %v86
    %v147 = vunpack.c.l.bf16 %v87
    %v148 = vunpack.c.h.bf16 %v87
    %v149 = vunpack.c.l.bf16 %v88
    %v150 = vunpack.c.h.bf16 %v88
    %v151 = vunpack.c.l.bf16 %v89
    %v152 = vunpack.c.h.bf16 %v89
    %v153 = vunpack.c.l.bf16 %v90
    %v154 = vunpack.c.h.bf16 %v90
    %v155 = vmax.f32 %v91, 1e-06
    %v156 = vmax.f32 %v92, 1e-06
    %v157 = vmax.f32 %v93, 1e-06
    %v158 = vmax.f32 %v94, 1e-06
    %v159 = vmax.f32 %v95, 1e-06
    %v160 = vmax.f32 %v96, 1e-06
    %v161 = vmax.f32 %v97, 1e-06
    %v162 = vmax.f32 %v98, 1e-06
    %v163 = vmax.f32 %v99, 1e-06
    %v164 = vmax.f32 %v100, 1e-06
    %v165 = vmax.f32 %v101, 1e-06
    %v166 = vmax.f32 %v102, 1e-06
    %v167 = vmax.f32 %v103, 1e-06
    %v168 = vmax.f32 %v104, 1e-06
    %v169 = vmax.f32 %v105, 1e-06
    %v170 = vmax.f32 %v106, 1e-06
    %v171 = vmax.f32 %v107, 1e-06
    %v172 = vmax.f32 %v108, 1e-06
    %v173 = vmax.f32 %v109, 1e-06
    %v174 = vmax.f32 %v110, 1e-06
    %v175 = vmax.f32 %v111, 1e-06
    %v176 = vmax.f32 %v112, 1e-06
    %v177 = vmax.f32 %v113, 1e-06
    %v178 = vmax.f32 %v114, 1e-06
    %v179 = vmax.f32 %v115, 1e-06
    %v180 = vmax.f32 %v116, 1e-06
    %v181 = vmax.f32 %v117, 1e-06
    %v182 = vmax.f32 %v118, 1e-06
    %v183 = vmax.f32 %v119, 1e-06
    %v184 = vmax.f32 %v120, 1e-06
    %v185 = vmax.f32 %v121, 1e-06
    %v186 = vmax.f32 %v122, 1e-06
    %v187 = vmax.f32 %v123, 1e-06
    %v188 = vmax.f32 %v124, 1e-06
    %v189 = vmax.f32 %v125, 1e-06
    %v190 = vmax.f32 %v126, 1e-06
    %v191 = vmax.f32 %v127, 1e-06
    %v192 = vmax.f32 %v128, 1e-06
    %v193 = vmax.f32 %v129, 1e-06
    %v194 = vmax.f32 %v130, 1e-06
    %v195 = vmax.f32 %v131, 1e-06
    %v196 = vmax.f32 %v132, 1e-06
    %v197 = vmax.f32 %v133, 1e-06
    %v198 = vmax.f32 %v134, 1e-06
    %v199 = vmax.f32 %v135, 1e-06
    %v200 = vmax.f32 %v136, 1e-06
    %v201 = vmax.f32 %v137, 1e-06
    %v202 = vmax.f32 %v138, 1e-06
    %v203 = vmax.f32 %v139, 1e-06
    %v204 = vmax.f32 %v140, 1e-06
    %v205 = vmax.f32 %v141, 1e-06
    %v206 = vmax.f32 %v142, 1e-06
    %v207 = vmax.f32 %v143, 1e-06
    %v208 = vmax.f32 %v144, 1e-06
    %v209 = vmax.f32 %v145, 1e-06
    %v210 = vmax.f32 %v146, 1e-06
    %v211 = vmax.f32 %v147, 1e-06
    %v212 = vmax.f32 %v148, 1e-06
    %v213 = vmax.f32 %v149, 1e-06
    %v214 = vmax.f32 %v150, 1e-06
    %v215 = vmax.f32 %v151, 1e-06
    %v216 = vmax.f32 %v152, 1e-06
    %v217 = vmax.f32 %v153, 1e-06
    %v218 = vmax.f32 %v154, 1e-06
    %v219 = vlog2.pop %v155
    %v220 = vmul.f32 %v219, 0.6931472
    %v221 = vlog2.pop %v156
    %v222 = vmul.f32 %v221, 0.6931472
    %v223 = vlog2.pop %v157
    %v224 = vmul.f32 %v223, 0.6931472
    %v225 = vlog2.pop %v158
    %v226 = vmul.f32 %v225, 0.6931472
    %v227 = vlog2.pop %v159
    %v228 = vmul.f32 %v227, 0.6931472
    %v229 = vlog2.pop %v160
    %v230 = vmul.f32 %v229, 0.6931472
    %v231 = vlog2.pop %v161
    %v232 = vmul.f32 %v231, 0.6931472
    %v233 = vlog2.pop %v162
    %v234 = vmul.f32 %v233, 0.6931472
    %v235 = vlog2.pop %v163
    %v236 = vmul.f32 %v235, 0.6931472
    %v237 = vlog2.pop %v164
    %v238 = vmul.f32 %v237, 0.6931472
    %v239 = vlog2.pop %v165
    %v240 = vmul.f32 %v239, 0.6931472
    %v241 = vlog2.pop %v166
    %v242 = vmul.f32 %v241, 0.6931472
    %v243 = vlog2.pop %v167
    %v244 = vmul.f32 %v243, 0.6931472
    %v245 = vlog2.pop %v168
    %v246 = vmul.f32 %v245, 0.6931472
    %v247 = vlog2.pop %v169
    %v248 = vmul.f32 %v247, 0.6931472
    %v249 = vlog2.pop %v170
    %v250 = vmul.f32 %v249, 0.6931472
    %v251 = vlog2.pop %v171
    %v252 = vmul.f32 %v251, 0.6931472
    %v253 = vlog2.pop %v172
    %v254 = vmul.f32 %v253, 0.6931472
    %v255 = vlog2.pop %v173
    %v256 = vmul.f32 %v255, 0.6931472
    %v257 = vlog2.pop %v174
    %v258 = vmul.f32 %v257, 0.6931472
    %v259 = vlog2.pop %v175
    %v260 = vmul.f32 %v259, 0.6931472
    %v261 = vlog2.pop %v176
    %v262 = vmul.f32 %v261, 0.6931472
    %v263 = vlog2.pop %v177
    %v264 = vmul.f32 %v263, 0.6931472
    %v265 = vlog2.pop %v178
    %v266 = vmul.f32 %v265, 0.6931472
    %v267 = vlog2.pop %v179
    %v268 = vmul.f32 %v267, 0.6931472
    %v269 = vlog2.pop %v180
    %v270 = vmul.f32 %v269, 0.6931472
    %v271 = vlog2.pop %v181
    %v272 = vmul.f32 %v271, 0.6931472
    %v273 = vlog2.pop %v182
    %v274 = vmul.f32 %v273, 0.6931472
    %v275 = vlog2.pop %v183
    %v276 = vmul.f32 %v275, 0.6931472
    %v277 = vlog2.pop %v184
    %v278 = vmul.f32 %v277, 0.6931472
    %v279 = vlog2.pop %v185
    %v280 = vmul.f32 %v279, 0.6931472
    %v281 = vlog2.pop %v186
    %v282 = vmul.f32 %v281, 0.6931472
    %v283 = vlog2.pop %v187
    %v284 = vmul.f32 %v283, 0.6931472
    %v285 = vlog2.pop %v188
    %v286 = vmul.f32 %v285, 0.6931472
    %v287 = vlog2.pop %v189
    %v288 = vmul.f32 %v287, 0.6931472
    %v289 = vlog2.pop %v190
    %v290 = vmul.f32 %v289, 0.6931472
    %v291 = vlog2.pop %v191
    %v292 = vmul.f32 %v291, 0.6931472
    %v293 = vlog2.pop %v192
    %v294 = vmul.f32 %v293, 0.6931472
    %v295 = vlog2.pop %v193
    %v296 = vmul.f32 %v295, 0.6931472
    %v297 = vlog2.pop %v194
    %v298 = vmul.f32 %v297, 0.6931472
    %v299 = vlog2.pop %v195
    %v300 = vmul.f32 %v299, 0.6931472
    %v301 = vlog2.pop %v196
    %v302 = vmul.f32 %v301, 0.6931472
    %v303 = vlog2.pop %v197
    %v304 = vmul.f32 %v303, 0.6931472
    %v305 = vlog2.pop %v198
    %v306 = vmul.f32 %v305, 0.6931472
    %v307 = vlog2.pop %v199
    %v308 = vmul.f32 %v307, 0.6931472
    %v309 = vlog2.pop %v200
    %v310 = vmul.f32 %v309, 0.6931472
    %v311 = vlog2.pop %v201
    %v312 = vmul.f32 %v311, 0.6931472
    %v313 = vlog2.pop %v202
    %v314 = vmul.f32 %v313, 0.6931472
    %v315 = vlog2.pop %v203
    %v316 = vmul.f32 %v315, 0.6931472
    %v317 = vlog2.pop %v204
    %v318 = vmul.f32 %v317, 0.6931472
    %v319 = vlog2.pop %v205
    %v320 = vmul.f32 %v319, 0.6931472
    %v321 = vlog2.pop %v206
    %v322 = vmul.f32 %v321, 0.6931472
    %v323 = vlog2.pop %v207
    %v324 = vmul.f32 %v323, 0.6931472
    %v325 = vlog2.pop %v208
    %v326 = vmul.f32 %v325, 0.6931472
    %v327 = vlog2.pop %v209
    %v328 = vmul.f32 %v327, 0.6931472
    %v329 = vlog2.pop %v210
    %v330 = vmul.f32 %v329, 0.6931472
    %v331 = vlog2.pop %v211
    %v332 = vmul.f32 %v331, 0.6931472
    %v333 = vlog2.pop %v212
    %v334 = vmul.f32 %v333, 0.6931472
    %v335 = vlog2.pop %v213
    %v336 = vmul.f32 %v335, 0.6931472
    %v337 = vlog2.pop %v214
    %v338 = vmul.f32 %v337, 0.6931472
    %v339 = vlog2.pop %v215
    %v340 = vmul.f32 %v339, 0.6931472
    %v341 = vlog2.pop %v216
    %v342 = vmul.f32 %v341, 0.6931472
    %v343 = vlog2.pop %v217
    %v344 = vmul.f32 %v343, 0.6931472
    %v345 = vlog2.pop %v218
    %v346 = vmul.f32 %v345, 0.6931472
    %v347 = vstv %s58
    %v348 = vmul.f32 %v347, %v220
    %v349 = vmul.f32 %v347, %v222
    %v350 = vmul.f32 %v347, %v224
    %v351 = vmul.f32 %v347, %v226
    %v352 = vmul.f32 %v347, %v228
    %v353 = vmul.f32 %v347, %v230
    %v354 = vmul.f32 %v347, %v232
    %v355 = vmul.f32 %v347, %v234
    %v356 = vmul.f32 %v347, %v236
    %v357 = vmul.f32 %v347, %v238
    %v358 = vmul.f32 %v347, %v240
    %v359 = vmul.f32 %v347, %v242
    %v360 = vmul.f32 %v347, %v244
    %v361 = vmul.f32 %v347, %v246
    %v362 = vmul.f32 %v347, %v248
    %v363 = vmul.f32 %v347, %v250
    %v364 = vmul.f32 %v347, %v252
    %v365 = vmul.f32 %v347, %v254
    %v366 = vmul.f32 %v347, %v256
    %v367 = vmul.f32 %v347, %v258
    %v368 = vmul.f32 %v347, %v260
    %v369 = vmul.f32 %v347, %v262
    %v370 = vmul.f32 %v347, %v264
    %v371 = vmul.f32 %v347, %v266
    %v372 = vmul.f32 %v347, %v268
    %v373 = vmul.f32 %v347, %v270
    %v374 = vmul.f32 %v347, %v272
    %v375 = vmul.f32 %v347, %v274
    %v376 = vmul.f32 %v347, %v276
    %v377 = vmul.f32 %v347, %v278
    %v378 = vmul.f32 %v347, %v280
    %v379 = vmul.f32 %v347, %v282
    %v380 = vmul.f32 %v347, %v284
    %v381 = vmul.f32 %v347, %v286
    %v382 = vmul.f32 %v347, %v288
    %v383 = vmul.f32 %v347, %v290
    %v384 = vmul.f32 %v347, %v292
    %v385 = vmul.f32 %v347, %v294
    %v386 = vmul.f32 %v347, %v296
    %v387 = vmul.f32 %v347, %v298
    %v388 = vmul.f32 %v347, %v300
    %v389 = vmul.f32 %v347, %v302
    %v390 = vmul.f32 %v347, %v304
    %v391 = vmul.f32 %v347, %v306
    %v392 = vmul.f32 %v347, %v308
    %v393 = vmul.f32 %v347, %v310
    %v394 = vmul.f32 %v347, %v312
    %v395 = vmul.f32 %v347, %v314
    %v396 = vmul.f32 %v347, %v316
    %v397 = vmul.f32 %v347, %v318
    %v398 = vmul.f32 %v347, %v320
    %v399 = vmul.f32 %v347, %v322
    %v400 = vmul.f32 %v347, %v324
    %v401 = vmul.f32 %v347, %v326
    %v402 = vmul.f32 %v347, %v328
    %v403 = vmul.f32 %v347, %v330
    %v404 = vmul.f32 %v347, %v332
    %v405 = vmul.f32 %v347, %v334
    %v406 = vmul.f32 %v347, %v336
    %v407 = vmul.f32 %v347, %v338
    %v408 = vmul.f32 %v347, %v340
    %v409 = vmul.f32 %v347, %v342
    %v410 = vmul.f32 %v347, %v344
    %v411 = vmul.f32 %v347, %v346
    %v412 = vmul.f32 %v348, 1.442695
    %v413 = vpow.pop %v412
    %v414 = vmul.f32 %v349, 1.442695
    %v415 = vpow.pop %v414
    %v416 = vmul.f32 %v350, 1.442695
    %v417 = vpow.pop %v416
    %v418 = vmul.f32 %v351, 1.442695
    %v419 = vpow.pop %v418
    %v420 = vmul.f32 %v352, 1.442695
    %v421 = vpow.pop %v420
    %v422 = vmul.f32 %v353, 1.442695
    %v423 = vpow.pop %v422
    %v424 = vmul.f32 %v354, 1.442695
    %v425 = vpow.pop %v424
    %v426 = vmul.f32 %v355, 1.442695
    %v427 = vpow.pop %v426
    %v428 = vmul.f32 %v356, 1.442695
    %v429 = vpow.pop %v428
    %v430 = vmul.f32 %v357, 1.442695
    %v431 = vpow.pop %v430
    %v432 = vmul.f32 %v358, 1.442695
    %v433 = vpow.pop %v432
    %v434 = vmul.f32 %v359, 1.442695
    %v435 = vpow.pop %v434
    %v436 = vmul.f32 %v360, 1.442695
    %v437 = vpow.pop %v436
    %v438 = vmul.f32 %v361, 1.442695
    %v439 = vpow.pop %v438
    %v440 = vmul.f32 %v362, 1.442695
    %v441 = vpow.pop %v440
    %v442 = vmul.f32 %v363, 1.442695
    %v443 = vpow.pop %v442
    %v444 = vmul.f32 %v364, 1.442695
    %v445 = vpow.pop %v444
    %v446 = vmul.f32 %v365, 1.442695
    %v447 = vpow.pop %v446
    %v448 = vmul.f32 %v366, 1.442695
    %v449 = vpow.pop %v448
    %v450 = vmul.f32 %v367, 1.442695
    %v451 = vpow.pop %v450
    %v452 = vmul.f32 %v368, 1.442695
    %v453 = vpow.pop %v452
    %v454 = vmul.f32 %v369, 1.442695
    %v455 = vpow.pop %v454
    %v456 = vmul.f32 %v370, 1.442695
    %v457 = vpow.pop %v456
    %v458 = vmul.f32 %v371, 1.442695
    %v459 = vpow.pop %v458
    %v460 = vmul.f32 %v372, 1.442695
    %v461 = vpow.pop %v460
    %v462 = vmul.f32 %v373, 1.442695
    %v463 = vpow.pop %v462
    %v464 = vmul.f32 %v374, 1.442695
    %v465 = vpow.pop %v464
    %v466 = vmul.f32 %v375, 1.442695
    %v467 = vpow.pop %v466
    %v468 = vmul.f32 %v376, 1.442695
    %v469 = vpow.pop %v468
    %v470 = vmul.f32 %v377, 1.442695
    %v471 = vpow.pop %v470
    %v472 = vmul.f32 %v378, 1.442695
    %v473 = vpow.pop %v472
    %v474 = vmul.f32 %v379, 1.442695
    %v475 = vpow.pop %v474
    %v476 = vmul.f32 %v380, 1.442695
    %v477 = vpow.pop %v476
    %v478 = vmul.f32 %v381, 1.442695
    %v479 = vpow.pop %v478
    %v480 = vmul.f32 %v382, 1.442695
    %v481 = vpow.pop %v480
    %v482 = vmul.f32 %v383, 1.442695
    %v483 = vpow.pop %v482
    %v484 = vmul.f32 %v384, 1.442695
    %v485 = vpow.pop %v484
    %v486 = vmul.f32 %v385, 1.442695
    %v487 = vpow.pop %v486
    %v488 = vmul.f32 %v386, 1.442695
    %v489 = vpow.pop %v488
    %v490 = vmul.f32 %v387, 1.442695
    %v491 = vpow.pop %v490
    %v492 = vmul.f32 %v388, 1.442695
    %v493 = vpow.pop %v492
    %v494 = vmul.f32 %v389, 1.442695
    %v495 = vpow.pop %v494
    %v496 = vmul.f32 %v390, 1.442695
    %v497 = vpow.pop %v496
    %v498 = vmul.f32 %v391, 1.442695
    %v499 = vpow.pop %v498
    %v500 = vmul.f32 %v392, 1.442695
    %v501 = vpow.pop %v500
    %v502 = vmul.f32 %v393, 1.442695
    %v503 = vpow.pop %v502
    %v504 = vmul.f32 %v394, 1.442695
    %v505 = vpow.pop %v504
    %v506 = vmul.f32 %v395, 1.442695
    %v507 = vpow.pop %v506
    %v508 = vmul.f32 %v396, 1.442695
    %v509 = vpow.pop %v508
    %v510 = vmul.f32 %v397, 1.442695
    %v511 = vpow.pop %v510
    %v512 = vmul.f32 %v398, 1.442695
    %v513 = vpow.pop %v512
    %v514 = vmul.f32 %v399, 1.442695
    %v515 = vpow.pop %v514
    %v516 = vmul.f32 %v400, 1.442695
    %v517 = vpow.pop %v516
    %v518 = vmul.f32 %v401, 1.442695
    %v519 = vpow.pop %v518
    %v520 = vmul.f32 %v402, 1.442695
    %v521 = vpow.pop %v520
    %v522 = vmul.f32 %v403, 1.442695
    %v523 = vpow.pop %v522
    %v524 = vmul.f32 %v404, 1.442695
    %v525 = vpow.pop %v524
    %v526 = vmul.f32 %v405, 1.442695
    %v527 = vpow.pop %v526
    %v528 = vmul.f32 %v406, 1.442695
    %v529 = vpow.pop %v528
    %v530 = vmul.f32 %v407, 1.442695
    %v531 = vpow.pop %v530
    %v532 = vmul.f32 %v408, 1.442695
    %v533 = vpow.pop %v532
    %v534 = vmul.f32 %v409, 1.442695
    %v535 = vpow.pop %v534
    %v536 = vmul.f32 %v410, 1.442695
    %v537 = vpow.pop %v536
    %v538 = vmul.f32 %v411, 1.442695
    %v539 = vpow.pop %v538
    %v540 = vadd.f32 %v413, %v445
    %v541 = vrot.slane %v540, 4
    %v542 = vadd.f32 %v540, %v541
    %v543 = vrot.slane %v542, 2
    %v544 = vadd.f32 %v542, %v543
    %v545 = vrot.slane %v544, 1
    %v546 = vadd.f32 %v544, %v545
    %v547 = vadd.f32 %v415, %v447
    %v548 = vrot.slane %v547, 4
    %v549 = vadd.f32 %v547, %v548
    %v550 = vrot.slane %v549, 2
    %v551 = vadd.f32 %v549, %v550
    %v552 = vrot.slane %v551, 1
    %v553 = vadd.f32 %v551, %v552
    %v554 = vadd.f32 %v417, %v449
    %v555 = vrot.slane %v554, 4
    %v556 = vadd.f32 %v554, %v555
    %v557 = vrot.slane %v556, 2
    %v558 = vadd.f32 %v556, %v557
    %v559 = vrot.slane %v558, 1
    %v560 = vadd.f32 %v558, %v559
    %v561 = vadd.f32 %v419, %v451
    %v562 = vrot.slane %v561, 4
    %v563 = vadd.f32 %v561, %v562
    %v564 = vrot.slane %v563, 2
    %v565 = vadd.f32 %v563, %v564
    %v566 = vrot.slane %v565, 1
    %v567 = vadd.f32 %v565, %v566
    %v568 = vadd.f32 %v421, %v453
    %v569 = vrot.slane %v568, 4
    %v570 = vadd.f32 %v568, %v569
    %v571 = vrot.slane %v570, 2
    %v572 = vadd.f32 %v570, %v571
    %v573 = vrot.slane %v572, 1
    %v574 = vadd.f32 %v572, %v573
    %v575 = vadd.f32 %v423, %v455
    %v576 = vrot.slane %v575, 4
    %v577 = vadd.f32 %v575, %v576
    %v578 = vrot.slane %v577, 2
    %v579 = vadd.f32 %v577, %v578
    %v580 = vrot.slane %v579, 1
    %v581 = vadd.f32 %v579, %v580
    %v582 = vadd.f32 %v425, %v457
    %v583 = vrot.slane %v582, 4
    %v584 = vadd.f32 %v582, %v583
    %v585 = vrot.slane %v584, 2
    %v586 = vadd.f32 %v584, %v585
    %v587 = vrot.slane %v586, 1
    %v588 = vadd.f32 %v586, %v587
    %v589 = vadd.f32 %v427, %v459
    %v590 = vrot.slane %v589, 4
    %v591 = vadd.f32 %v589, %v590
    %v592 = vrot.slane %v591, 2
    %v593 = vadd.f32 %v591, %v592
    %v594 = vrot.slane %v593, 1
    %v595 = vadd.f32 %v593, %v594
    %v596 = vadd.f32 %v429, %v461
    %v597 = vrot.slane %v596, 4
    %v598 = vadd.f32 %v596, %v597
    %v599 = vrot.slane %v598, 2
    %v600 = vadd.f32 %v598, %v599
    %v601 = vrot.slane %v600, 1
    %v602 = vadd.f32 %v600, %v601
    %v603 = vadd.f32 %v431, %v463
    %v604 = vrot.slane %v603, 4
    %v605 = vadd.f32 %v603, %v604
    %v606 = vrot.slane %v605, 2
    %v607 = vadd.f32 %v605, %v606
    %v608 = vrot.slane %v607, 1
    %v609 = vadd.f32 %v607, %v608
    %v610 = vadd.f32 %v433, %v465
    %v611 = vrot.slane %v610, 4
    %v612 = vadd.f32 %v610, %v611
    %v613 = vrot.slane %v612, 2
    %v614 = vadd.f32 %v612, %v613
    %v615 = vrot.slane %v614, 1
    %v616 = vadd.f32 %v614, %v615
    %v617 = vadd.f32 %v435, %v467
    %v618 = vrot.slane %v617, 4
    %v619 = vadd.f32 %v617, %v618
    %v620 = vrot.slane %v619, 2
    %v621 = vadd.f32 %v619, %v620
    %v622 = vrot.slane %v621, 1
    %v623 = vadd.f32 %v621, %v622
    %v624 = vadd.f32 %v437, %v469
    %v625 = vrot.slane %v624, 4
    %v626 = vadd.f32 %v624, %v625
    %v627 = vrot.slane %v626, 2
    %v628 = vadd.f32 %v626, %v627
    %v629 = vrot.slane %v628, 1
    %v630 = vadd.f32 %v628, %v629
    %v631 = vadd.f32 %v439, %v471
    %v632 = vrot.slane %v631, 4
    %v633 = vadd.f32 %v631, %v632
    %v634 = vrot.slane %v633, 2
    %v635 = vadd.f32 %v633, %v634
    %v636 = vrot.slane %v635, 1
    %v637 = vadd.f32 %v635, %v636
    %v638 = vadd.f32 %v441, %v473
    %v639 = vrot.slane %v638, 4
    %v640 = vadd.f32 %v638, %v639
    %v641 = vrot.slane %v640, 2
    %v642 = vadd.f32 %v640, %v641
    %v643 = vrot.slane %v642, 1
    %v644 = vadd.f32 %v642, %v643
    %v645 = vadd.f32 %v443, %v475
    %v646 = vrot.slane %v645, 4
    %v647 = vadd.f32 %v645, %v646
    %v648 = vrot.slane %v647, 2
    %v649 = vadd.f32 %v647, %v648
    %v650 = vrot.slane %v649, 1
    %v651 = vadd.f32 %v649, %v650
    %v652 = vadd.f32 %v477, %v509
    %v653 = vrot.slane %v652, 4
    %v654 = vadd.f32 %v652, %v653
    %v655 = vrot.slane %v654, 2
    %v656 = vadd.f32 %v654, %v655
    %v657 = vrot.slane %v656, 1
    %v658 = vadd.f32 %v656, %v657
    %v659 = vadd.f32 %v479, %v511
    %v660 = vrot.slane %v659, 4
    %v661 = vadd.f32 %v659, %v660
    %v662 = vrot.slane %v661, 2
    %v663 = vadd.f32 %v661, %v662
    %v664 = vrot.slane %v663, 1
    %v665 = vadd.f32 %v663, %v664
    %v666 = vadd.f32 %v481, %v513
    %v667 = vrot.slane %v666, 4
    %v668 = vadd.f32 %v666, %v667
    %v669 = vrot.slane %v668, 2
    %v670 = vadd.f32 %v668, %v669
    %v671 = vrot.slane %v670, 1
    %v672 = vadd.f32 %v670, %v671
    %v673 = vadd.f32 %v483, %v515
    %v674 = vrot.slane %v673, 4
    %v675 = vadd.f32 %v673, %v674
    %v676 = vrot.slane %v675, 2
    %v677 = vadd.f32 %v675, %v676
    %v678 = vrot.slane %v677, 1
    %v679 = vadd.f32 %v677, %v678
    %v680 = vadd.f32 %v485, %v517
    %v681 = vrot.slane %v680, 4
    %v682 = vadd.f32 %v680, %v681
    %v683 = vrot.slane %v682, 2
    %v684 = vadd.f32 %v682, %v683
    %v685 = vrot.slane %v684, 1
    %v686 = vadd.f32 %v684, %v685
    %v687 = vadd.f32 %v487, %v519
    %v688 = vrot.slane %v687, 4
    %v689 = vadd.f32 %v687, %v688
    %v690 = vrot.slane %v689, 2
    %v691 = vadd.f32 %v689, %v690
    %v692 = vrot.slane %v691, 1
    %v693 = vadd.f32 %v691, %v692
    %v694 = vadd.f32 %v489, %v521
    %v695 = vrot.slane %v694, 4
    %v696 = vadd.f32 %v694, %v695
    %v697 = vrot.slane %v696, 2
    %v698 = vadd.f32 %v696, %v697
    %v699 = vrot.slane %v698, 1
    %v700 = vadd.f32 %v698, %v699
    %v701 = vadd.f32 %v491, %v523
    %v702 = vrot.slane %v701, 4
    %v703 = vadd.f32 %v701, %v702
    %v704 = vrot.slane %v703, 2
    %v705 = vadd.f32 %v703, %v704
    %v706 = vrot.slane %v705, 1
    %v707 = vadd.f32 %v705, %v706
    %v708 = vadd.f32 %v493, %v525
    %v709 = vrot.slane %v708, 4
    %v710 = vadd.f32 %v708, %v709
    %v711 = vrot.slane %v710, 2
    %v712 = vadd.f32 %v710, %v711
    %v713 = vrot.slane %v712, 1
    %v714 = vadd.f32 %v712, %v713
    %v715 = vadd.f32 %v495, %v527
    %v716 = vrot.slane %v715, 4
    %v717 = vadd.f32 %v715, %v716
    %v718 = vrot.slane %v717, 2
    %v719 = vadd.f32 %v717, %v718
    %v720 = vrot.slane %v719, 1
    %v721 = vadd.f32 %v719, %v720
    %v722 = vadd.f32 %v497, %v529
    %v723 = vrot.slane %v722, 4
    %v724 = vadd.f32 %v722, %v723
    %v725 = vrot.slane %v724, 2
    %v726 = vadd.f32 %v724, %v725
    %v727 = vrot.slane %v726, 1
    %v728 = vadd.f32 %v726, %v727
    %v729 = vadd.f32 %v499, %v531
    %v730 = vrot.slane %v729, 4
    %v731 = vadd.f32 %v729, %v730
    %v732 = vrot.slane %v731, 2
    %v733 = vadd.f32 %v731, %v732
    %v734 = vrot.slane %v733, 1
    %v735 = vadd.f32 %v733, %v734
    %v736 = vadd.f32 %v501, %v533
    %v737 = vrot.slane %v736, 4
    %v738 = vadd.f32 %v736, %v737
    %v739 = vrot.slane %v738, 2
    %v740 = vadd.f32 %v738, %v739
    %v741 = vrot.slane %v740, 1
    %v742 = vadd.f32 %v740, %v741
    %v743 = vadd.f32 %v503, %v535
    %v744 = vrot.slane %v743, 4
    %v745 = vadd.f32 %v743, %v744
    %v746 = vrot.slane %v745, 2
    %v747 = vadd.f32 %v745, %v746
    %v748 = vrot.slane %v747, 1
    %v749 = vadd.f32 %v747, %v748
    %v750 = vadd.f32 %v505, %v537
    %v751 = vrot.slane %v750, 4
    %v752 = vadd.f32 %v750, %v751
    %v753 = vrot.slane %v752, 2
    %v754 = vadd.f32 %v752, %v753
    %v755 = vrot.slane %v754, 1
    %v756 = vadd.f32 %v754, %v755
    %v757 = vadd.f32 %v507, %v539
    %v758 = vrot.slane %v757, 4
    %v759 = vadd.f32 %v757, %v758
    %v760 = vrot.slane %v759, 2
    %v761 = vadd.f32 %v759, %v760
    %v762 = vrot.slane %v761, 1
    %v763 = vadd.f32 %v761, %v762
    %v764 = vrcp.pop 16.0
    %v765 = vmul.f32 %v546, %v764
    %v766 = vmul.f32 %v553, %v764
    %v767 = vmul.f32 %v560, %v764
    %v768 = vmul.f32 %v567, %v764
    %v769 = vmul.f32 %v574, %v764
    %v770 = vmul.f32 %v581, %v764
    %v771 = vmul.f32 %v588, %v764
    %v772 = vmul.f32 %v595, %v764
    %v773 = vmul.f32 %v602, %v764
    %v774 = vmul.f32 %v609, %v764
    %v775 = vmul.f32 %v616, %v764
    %v776 = vmul.f32 %v623, %v764
    %v777 = vmul.f32 %v630, %v764
    %v778 = vmul.f32 %v637, %v764
    %v779 = vmul.f32 %v644, %v764
    %v780 = vmul.f32 %v651, %v764
    %v781 = vmul.f32 %v658, %v764
    %v782 = vmul.f32 %v665, %v764
    %v783 = vmul.f32 %v672, %v764
    %v784 = vmul.f32 %v679, %v764
    %v785 = vmul.f32 %v686, %v764
    %v786 = vmul.f32 %v693, %v764
    %v787 = vmul.f32 %v700, %v764
    %v788 = vmul.f32 %v707, %v764
    %v789 = vmul.f32 %v714, %v764
    %v790 = vmul.f32 %v721, %v764
    %v791 = vmul.f32 %v728, %v764
    %v792 = vmul.f32 %v735, %v764
    %v793 = vmul.f32 %v742, %v764
    %v794 = vmul.f32 %v749, %v764
    %v795 = vmul.f32 %v756, %v764
    %v796 = vmul.f32 %v763, %v764
    %v797 = vlog2.pop %v765
    %v798 = vmul.f32 %v797, 0.6931472
    %v799 = vlog2.pop %v766
    %v800 = vmul.f32 %v799, 0.6931472
    %v801 = vlog2.pop %v767
    %v802 = vmul.f32 %v801, 0.6931472
    %v803 = vlog2.pop %v768
    %v804 = vmul.f32 %v803, 0.6931472
    %v805 = vlog2.pop %v769
    %v806 = vmul.f32 %v805, 0.6931472
    %v807 = vlog2.pop %v770
    %v808 = vmul.f32 %v807, 0.6931472
    %v809 = vlog2.pop %v771
    %v810 = vmul.f32 %v809, 0.6931472
    %v811 = vlog2.pop %v772
    %v812 = vmul.f32 %v811, 0.6931472
    %v813 = vlog2.pop %v773
    %v814 = vmul.f32 %v813, 0.6931472
    %v815 = vlog2.pop %v774
    %v816 = vmul.f32 %v815, 0.6931472
    %v817 = vlog2.pop %v775
    %v818 = vmul.f32 %v817, 0.6931472
    %v819 = vlog2.pop %v776
    %v820 = vmul.f32 %v819, 0.6931472
    %v821 = vlog2.pop %v777
    %v822 = vmul.f32 %v821, 0.6931472
    %v823 = vlog2.pop %v778
    %v824 = vmul.f32 %v823, 0.6931472
    %v825 = vlog2.pop %v779
    %v826 = vmul.f32 %v825, 0.6931472
    %v827 = vlog2.pop %v780
    %v828 = vmul.f32 %v827, 0.6931472
    %v829 = vlog2.pop %v781
    %v830 = vmul.f32 %v829, 0.6931472
    %v831 = vlog2.pop %v782
    %v832 = vmul.f32 %v831, 0.6931472
    %v833 = vlog2.pop %v783
    %v834 = vmul.f32 %v833, 0.6931472
    %v835 = vlog2.pop %v784
    %v836 = vmul.f32 %v835, 0.6931472
    %v837 = vlog2.pop %v785
    %v838 = vmul.f32 %v837, 0.6931472
    %v839 = vlog2.pop %v786
    %v840 = vmul.f32 %v839, 0.6931472
    %v841 = vlog2.pop %v787
    %v842 = vmul.f32 %v841, 0.6931472
    %v843 = vlog2.pop %v788
    %v844 = vmul.f32 %v843, 0.6931472
    %v845 = vlog2.pop %v789
    %v846 = vmul.f32 %v845, 0.6931472
    %v847 = vlog2.pop %v790
    %v848 = vmul.f32 %v847, 0.6931472
    %v849 = vlog2.pop %v791
    %v850 = vmul.f32 %v849, 0.6931472
    %v851 = vlog2.pop %v792
    %v852 = vmul.f32 %v851, 0.6931472
    %v853 = vlog2.pop %v793
    %v854 = vmul.f32 %v853, 0.6931472
    %v855 = vlog2.pop %v794
    %v856 = vmul.f32 %v855, 0.6931472
    %v857 = vlog2.pop %v795
    %v858 = vmul.f32 %v857, 0.6931472
    %v859 = vlog2.pop %v796
    %v860 = vmul.f32 %v859, 0.6931472
    %v861 = vstv %s58
    %v862 = vrcp.pop %v861
    %s863 = vtos %v862
    %v864 = vstv %s863
    %v865 = vmul.f32 %v798, %v864
    %v866 = vmul.f32 %v800, %v864
    %v867 = vmul.f32 %v802, %v864
    %v868 = vmul.f32 %v804, %v864
    %v869 = vmul.f32 %v806, %v864
    %v870 = vmul.f32 %v808, %v864
    %v871 = vmul.f32 %v810, %v864
    %v872 = vmul.f32 %v812, %v864
    %v873 = vmul.f32 %v814, %v864
    %v874 = vmul.f32 %v816, %v864
    %v875 = vmul.f32 %v818, %v864
    %v876 = vmul.f32 %v820, %v864
    %v877 = vmul.f32 %v822, %v864
    %v878 = vmul.f32 %v824, %v864
    %v879 = vmul.f32 %v826, %v864
    %v880 = vmul.f32 %v828, %v864
    %v881 = vmul.f32 %v830, %v864
    %v882 = vmul.f32 %v832, %v864
    %v883 = vmul.f32 %v834, %v864
    %v884 = vmul.f32 %v836, %v864
    %v885 = vmul.f32 %v838, %v864
    %v886 = vmul.f32 %v840, %v864
    %v887 = vmul.f32 %v842, %v864
    %v888 = vmul.f32 %v844, %v864
    %v889 = vmul.f32 %v846, %v864
    %v890 = vmul.f32 %v848, %v864
    %v891 = vmul.f32 %v850, %v864
    %v892 = vmul.f32 %v852, %v864
    %v893 = vmul.f32 %v854, %v864
    %v894 = vmul.f32 %v856, %v864
    %v895 = vmul.f32 %v858, %v864
    %v896 = vmul.f32 %v860, %v864
    %v897 = vmul.f32 %v865, 1.442695
    %v898 = vpow.pop %v897
    %v899 = vmul.f32 %v866, 1.442695
    %v900 = vpow.pop %v899
    %v901 = vmul.f32 %v867, 1.442695
    %v902 = vpow.pop %v901
    %v903 = vmul.f32 %v868, 1.442695
    %v904 = vpow.pop %v903
    %v905 = vmul.f32 %v869, 1.442695
    %v906 = vpow.pop %v905
    %v907 = vmul.f32 %v870, 1.442695
    %v908 = vpow.pop %v907
    %v909 = vmul.f32 %v871, 1.442695
    %v910 = vpow.pop %v909
    %v911 = vmul.f32 %v872, 1.442695
    %v912 = vpow.pop %v911
    %v913 = vmul.f32 %v873, 1.442695
    %v914 = vpow.pop %v913
    %v915 = vmul.f32 %v874, 1.442695
    %v916 = vpow.pop %v915
    %v917 = vmul.f32 %v875, 1.442695
    %v918 = vpow.pop %v917
    %v919 = vmul.f32 %v876, 1.442695
    %v920 = vpow.pop %v919
    %v921 = vmul.f32 %v877, 1.442695
    %v922 = vpow.pop %v921
    %v923 = vmul.f32 %v878, 1.442695
    %v924 = vpow.pop %v923
    %v925 = vmul.f32 %v879, 1.442695
    %v926 = vpow.pop %v925
    %v927 = vmul.f32 %v880, 1.442695
    %v928 = vpow.pop %v927
    %v929 = vmul.f32 %v881, 1.442695
    %v930 = vpow.pop %v929
    %v931 = vmul.f32 %v882, 1.442695
    %v932 = vpow.pop %v931
    %v933 = vmul.f32 %v883, 1.442695
    %v934 = vpow.pop %v933
    %v935 = vmul.f32 %v884, 1.442695
    %v936 = vpow.pop %v935
    %v937 = vmul.f32 %v885, 1.442695
    %v938 = vpow.pop %v937
    %v939 = vmul.f32 %v886, 1.442695
    %v940 = vpow.pop %v939
    %v941 = vmul.f32 %v887, 1.442695
    %v942 = vpow.pop %v941
    %v943 = vmul.f32 %v888, 1.442695
    %v944 = vpow.pop %v943
    %v945 = vmul.f32 %v889, 1.442695
    %v946 = vpow.pop %v945
    %v947 = vmul.f32 %v890, 1.442695
    %v948 = vpow.pop %v947
    %v949 = vmul.f32 %v891, 1.442695
    %v950 = vpow.pop %v949
    %v951 = vmul.f32 %v892, 1.442695
    %v952 = vpow.pop %v951
    %v953 = vmul.f32 %v893, 1.442695
    %v954 = vpow.pop %v953
    %v955 = vmul.f32 %v894, 1.442695
    %v956 = vpow.pop %v955
    %v957 = vmul.f32 %v895, 1.442695
    %v958 = vpow.pop %v957
    %v959 = vmul.f32 %v896, 1.442695
    %v960 = vpow.pop %v959
    %v961 = vld [vmem:[#allocation6] sm:$0xff]
    %v962 = vld [vmem:[#allocation6 + $0x8] sm:$0xff]
    %v963 = vld [vmem:[#allocation6 + $0x10] sm:$0xff]
    %v964 = vld [vmem:[#allocation6 + $0x18] sm:$0xff]
    %v965 = vld [vmem:[#allocation6 + $0x20] sm:$0xff]
    %v966 = vld [vmem:[#allocation6 + $0x28] sm:$0xff]
    %v967 = vld [vmem:[#allocation6 + $0x30] sm:$0xff]
    %v968 = vld [vmem:[#allocation6 + $0x38] sm:$0xff]
    %v969 = vld [vmem:[#allocation6 + $0x40] sm:$0xff]
    %v970 = vld [vmem:[#allocation6 + $0x48] sm:$0xff]
    %v971 = vld [vmem:[#allocation6 + $0x50] sm:$0xff]
    %v972 = vld [vmem:[#allocation6 + $0x58] sm:$0xff]
    %v973 = vld [vmem:[#allocation6 + $0x60] sm:$0xff]
    %v974 = vld [vmem:[#allocation6 + $0x68] sm:$0xff]
    %v975 = vld [vmem:[#allocation6 + $0x70] sm:$0xff]
    %v976 = vld [vmem:[#allocation6 + $0x78] sm:$0xff]
    %v977 = vld [vmem:[#allocation6 + $0x80] sm:$0xff]
    %v978 = vld [vmem:[#allocation6 + $0x88] sm:$0xff]
    %v979 = vld [vmem:[#allocation6 + $0x90] sm:$0xff]
    %v980 = vld [vmem:[#allocation6 + $0x98] sm:$0xff]
    %v981 = vld [vmem:[#allocation6 + $0xa0] sm:$0xff]
    %v982 = vld [vmem:[#allocation6 + $0xa8] sm:$0xff]
    %v983 = vld [vmem:[#allocation6 + $0xb0] sm:$0xff]
    %v984 = vld [vmem:[#allocation6 + $0xb8] sm:$0xff]
    %v985 = vld [vmem:[#allocation6 + $0xc0] sm:$0xff]
    %v986 = vld [vmem:[#allocation6 + $0xc8] sm:$0xff]
    %v987 = vld [vmem:[#allocation6 + $0xd0] sm:$0xff]
    %v988 = vld [vmem:[#allocation6 + $0xd8] sm:$0xff]
    %v989 = vld [vmem:[#allocation6 + $0xe0] sm:$0xff]
    %v990 = vld [vmem:[#allocation6 + $0xe8] sm:$0xff]
    %v991 = vld [vmem:[#allocation6 + $0xf0] sm:$0xff]
    %v992 = vld [vmem:[#allocation6 + $0xf8] sm:$0xff]
    %v993 = vld [vmem:[#allocation6 + $0x100] sm:$0xff]
    %v994 = vld [vmem:[#allocation6 + $0x108] sm:$0xff]
    %v995 = vld [vmem:[#allocation6 + $0x110] sm:$0xff]
    %v996 = vld [vmem:[#allocation6 + $0x118] sm:$0xff]
    %v997 = vld [vmem:[#allocation6 + $0x120] sm:$0xff]
    %v998 = vld [vmem:[#allocation6 + $0x128] sm:$0xff]
    %v999 = vld [vmem:[#allocation6 + $0x130] sm:$0xff]
    %v1000 = vld [vmem:[#allocation6 + $0x138] sm:$0xff]
    %v1001 = vld [vmem:[#allocation6 + $0x140] sm:$0xff]
    %v1002 = vld [vmem:[#allocation6 + $0x148] sm:$0xff]
    %v1003 = vld [vmem:[#allocation6 + $0x150] sm:$0xff]
    %v1004 = vld [vmem:[#allocation6 + $0x158] sm:$0xff]
    %v1005 = vld [vmem:[#allocation6 + $0x160] sm:$0xff]
    %v1006 = vld [vmem:[#allocation6 + $0x168] sm:$0xff]
    %v1007 = vld [vmem:[#allocation6 + $0x170] sm:$0xff]
    %v1008 = vld [vmem:[#allocation6 + $0x178] sm:$0xff]
    %v1009 = vld [vmem:[#allocation6 + $0x180] sm:$0xff]
    %v1010 = vld [vmem:[#allocation6 + $0x188] sm:$0xff]
    %v1011 = vld [vmem:[#allocation6 + $0x190] sm:$0xff]
    %v1012 = vld [vmem:[#allocation6 + $0x198] sm:$0xff]
    %v1013 = vld [vmem:[#allocation6 + $0x1a0] sm:$0xff]
    %v1014 = vld [vmem:[#allocation6 + $0x1a8] sm:$0xff]
    %v1015 = vld [vmem:[#allocation6 + $0x1b0] sm:$0xff]
    %v1016 = vld [vmem:[#allocation6 + $0x1b8] sm:$0xff]
    %v1017 = vld [vmem:[#allocation6 + $0x1c0] sm:$0xff]
    %v1018 = vld [vmem:[#allocation6 + $0x1c8] sm:$0xff]
    %v1019 = vld [vmem:[#allocation6 + $0x1d0] sm:$0xff]
    %v1020 = vld [vmem:[#allocation6 + $0x1d8] sm:$0xff]
    %v1021 = vld [vmem:[#allocation6 + $0x1e0] sm:$0xff]
    %v1022 = vld [vmem:[#allocation6 + $0x1e8] sm:$0xff]
    %v1023 = vld [vmem:[#allocation6 + $0x1f0] sm:$0xff]
    %v1024 = vld [vmem:[#allocation6 + $0x1f8] sm:$0xff]
    %v1025 = vld [vmem:[#allocation6 + $0x200] sm:$0xff]
    %v1026 = vld [vmem:[#allocation6 + $0x208] sm:$0xff]
    %v1027 = vld [vmem:[#allocation6 + $0x210] sm:$0xff]
    %v1028 = vld [vmem:[#allocation6 + $0x218] sm:$0xff]
    %v1029 = vld [vmem:[#allocation6 + $0x220] sm:$0xff]
    %v1030 = vld [vmem:[#allocation6 + $0x228] sm:$0xff]
    %v1031 = vld [vmem:[#allocation6 + $0x230] sm:$0xff]
    %v1032 = vld [vmem:[#allocation6 + $0x238] sm:$0xff]
    %v1033 = vld [vmem:[#allocation6 + $0x240] sm:$0xff]
    %v1034 = vld [vmem:[#allocation6 + $0x248] sm:$0xff]
    %v1035 = vld [vmem:[#allocation6 + $0x250] sm:$0xff]
    %v1036 = vld [vmem:[#allocation6 + $0x258] sm:$0xff]
    %v1037 = vld [vmem:[#allocation6 + $0x260] sm:$0xff]
    %v1038 = vld [vmem:[#allocation6 + $0x268] sm:$0xff]
    %v1039 = vld [vmem:[#allocation6 + $0x270] sm:$0xff]
    %v1040 = vld [vmem:[#allocation6 + $0x278] sm:$0xff]
    %v1041 = vld [vmem:[#allocation6 + $0x280] sm:$0xff]
    %v1042 = vld [vmem:[#allocation6 + $0x288] sm:$0xff]
    %v1043 = vld [vmem:[#allocation6 + $0x290] sm:$0xff]
    %v1044 = vld [vmem:[#allocation6 + $0x298] sm:$0xff]
    %v1045 = vld [vmem:[#allocation6 + $0x2a0] sm:$0xff]
    %v1046 = vld [vmem:[#allocation6 + $0x2a8] sm:$0xff]
    %v1047 = vld [vmem:[#allocation6 + $0x2b0] sm:$0xff]
    %v1048 = vld [vmem:[#allocation6 + $0x2b8] sm:$0xff]
    %v1049 = vld [vmem:[#allocation6 + $0x2c0] sm:$0xff]
    %v1050 = vld [vmem:[#allocation6 + $0x2c8] sm:$0xff]
    %v1051 = vld [vmem:[#allocation6 + $0x2d0] sm:$0xff]
    %v1052 = vld [vmem:[#allocation6 + $0x2d8] sm:$0xff]
    %v1053 = vld [vmem:[#allocation6 + $0x2e0] sm:$0xff]
    %v1054 = vld [vmem:[#allocation6 + $0x2e8] sm:$0xff]
    %v1055 = vld [vmem:[#allocation6 + $0x2f0] sm:$0xff]
    %v1056 = vld [vmem:[#allocation6 + $0x2f8] sm:$0xff]
    %v1057 = vld [vmem:[#allocation6 + $0x300] sm:$0xff]
    %v1058 = vld [vmem:[#allocation6 + $0x308] sm:$0xff]
    %v1059 = vld [vmem:[#allocation6 + $0x310] sm:$0xff]
    %v1060 = vld [vmem:[#allocation6 + $0x318] sm:$0xff]
    %v1061 = vld [vmem:[#allocation6 + $0x320] sm:$0xff]
    %v1062 = vld [vmem:[#allocation6 + $0x328] sm:$0xff]
    %v1063 = vld [vmem:[#allocation6 + $0x330] sm:$0xff]
    %v1064 = vld [vmem:[#allocation6 + $0x338] sm:$0xff]
    %v1065 = vld [vmem:[#allocation6 + $0x340] sm:$0xff]
    %v1066 = vld [vmem:[#allocation6 + $0x348] sm:$0xff]
    %v1067 = vld [vmem:[#allocation6 + $0x350] sm:$0xff]
    %v1068 = vld [vmem:[#allocation6 + $0x358] sm:$0xff]
    %v1069 = vld [vmem:[#allocation6 + $0x360] sm:$0xff]
    %v1070 = vld [vmem:[#allocation6 + $0x368] sm:$0xff]
    %v1071 = vld [vmem:[#allocation6 + $0x370] sm:$0xff]
    %v1072 = vld [vmem:[#allocation6 + $0x378] sm:$0xff]
    %v1073 = vld [vmem:[#allocation6 + $0x380] sm:$0xff]
    %v1074 = vld [vmem:[#allocation6 + $0x388] sm:$0xff]
    %v1075 = vld [vmem:[#allocation6 + $0x390] sm:$0xff]
    %v1076 = vld [vmem:[#allocation6 + $0x398] sm:$0xff]
    %v1077 = vld [vmem:[#allocation6 + $0x3a0] sm:$0xff]
    %v1078 = vld [vmem:[#allocation6 + $0x3a8] sm:$0xff]
    %v1079 = vld [vmem:[#allocation6 + $0x3b0] sm:$0xff]
    %v1080 = vld [vmem:[#allocation6 + $0x3b8] sm:$0xff]
    %v1081 = vld [vmem:[#allocation6 + $0x3c0] sm:$0xff]
    %v1082 = vld [vmem:[#allocation6 + $0x3c8] sm:$0xff]
    %v1083 = vld [vmem:[#allocation6 + $0x3d0] sm:$0xff]
    %v1084 = vld [vmem:[#allocation6 + $0x3d8] sm:$0xff]
    %v1085 = vld [vmem:[#allocation6 + $0x3e0] sm:$0xff]
    %v1086 = vld [vmem:[#allocation6 + $0x3e8] sm:$0xff]
    %v1087 = vld [vmem:[#allocation6 + $0x3f0] sm:$0xff]
    %v1088 = vld [vmem:[#allocation6 + $0x3f8] sm:$0xff]
    %v1089 = vld [vmem:[#allocation6 + $0x400] sm:$0xff]
    %v1090 = vld [vmem:[#allocation6 + $0x408] sm:$0xff]
    %v1091 = vld [vmem:[#allocation6 + $0x410] sm:$0xff]
    %v1092 = vld [vmem:[#allocation6 + $0x418] sm:$0xff]
    %v1093 = vld [vmem:[#allocation6 + $0x420] sm:$0xff]
    %v1094 = vld [vmem:[#allocation6 + $0x428] sm:$0xff]
    %v1095 = vld [vmem:[#allocation6 + $0x430] sm:$0xff]
    %v1096 = vld [vmem:[#allocation6 + $0x438] sm:$0xff]
    %v1097 = vld [vmem:[#allocation6 + $0x440] sm:$0xff]
    %v1098 = vld [vmem:[#allocation6 + $0x448] sm:$0xff]
    %v1099 = vld [vmem:[#allocation6 + $0x450] sm:$0xff]
    %v1100 = vld [vmem:[#allocation6 + $0x458] sm:$0xff]
    %v1101 = vld [vmem:[#allocation6 + $0x460] sm:$0xff]
    %v1102 = vld [vmem:[#allocation6 + $0x468] sm:$0xff]
    %v1103 = vld [vmem:[#allocation6 + $0x470] sm:$0xff]
    %v1104 = vld [vmem:[#allocation6 + $0x478] sm:$0xff]
    %v1105 = vld [vmem:[#allocation6 + $0x480] sm:$0xff]
    %v1106 = vld [vmem:[#allocation6 + $0x488] sm:$0xff]
    %v1107 = vld [vmem:[#allocation6 + $0x490] sm:$0xff]
    %v1108 = vld [vmem:[#allocation6 + $0x498] sm:$0xff]
    %v1109 = vld [vmem:[#allocation6 + $0x4a0] sm:$0xff]
    %v1110 = vld [vmem:[#allocation6 + $0x4a8] sm:$0xff]
    %v1111 = vld [vmem:[#allocation6 + $0x4b0] sm:$0xff]
    %v1112 = vld [vmem:[#allocation6 + $0x4b8] sm:$0xff]
    %v1113 = vld [vmem:[#allocation6 + $0x4c0] sm:$0xff]
    %v1114 = vld [vmem:[#allocation6 + $0x4c8] sm:$0xff]
    %v1115 = vld [vmem:[#allocation6 + $0x4d0] sm:$0xff]
    %v1116 = vld [vmem:[#allocation6 + $0x4d8] sm:$0xff]
    %v1117 = vld [vmem:[#allocation6 + $0x4e0] sm:$0xff]
    %v1118 = vld [vmem:[#allocation6 + $0x4e8] sm:$0xff]
    %v1119 = vld [vmem:[#allocation6 + $0x4f0] sm:$0xff]
    %v1120 = vld [vmem:[#allocation6 + $0x4f8] sm:$0xff]
    %v1121 = vld [vmem:[#allocation6 + $0x500] sm:$0xff]
    %v1122 = vld [vmem:[#allocation6 + $0x508] sm:$0xff]
    %v1123 = vld [vmem:[#allocation6 + $0x510] sm:$0xff]
    %v1124 = vld [vmem:[#allocation6 + $0x518] sm:$0xff]
    %v1125 = vld [vmem:[#allocation6 + $0x520] sm:$0xff]
    %v1126 = vld [vmem:[#allocation6 + $0x528] sm:$0xff]
    %v1127 = vld [vmem:[#allocation6 + $0x530] sm:$0xff]
    %v1128 = vld [vmem:[#allocation6 + $0x538] sm:$0xff]
    %v1129 = vld [vmem:[#allocation6 + $0x540] sm:$0xff]
    %v1130 = vld [vmem:[#allocation6 + $0x548] sm:$0xff]
    %v1131 = vld [vmem:[#allocation6 + $0x550] sm:$0xff]
    %v1132 = vld [vmem:[#allocation6 + $0x558] sm:$0xff]
    %v1133 = vld [vmem:[#allocation6 + $0x560] sm:$0xff]
    %v1134 = vld [vmem:[#allocation6 + $0x568] sm:$0xff]
    %v1135 = vld [vmem:[#allocation6 + $0x570] sm:$0xff]
    %v1136 = vld [vmem:[#allocation6 + $0x578] sm:$0xff]
    %v1137 = vld [vmem:[#allocation6 + $0x580] sm:$0xff]
    %v1138 = vld [vmem:[#allocation6 + $0x588] sm:$0xff]
    %v1139 = vld [vmem:[#allocation6 + $0x590] sm:$0xff]
    %v1140 = vld [vmem:[#allocation6 + $0x598] sm:$0xff]
    %v1141 = vld [vmem:[#allocation6 + $0x5a0] sm:$0xff]
    %v1142 = vld [vmem:[#allocation6 + $0x5a8] sm:$0xff]
    %v1143 = vld [vmem:[#allocation6 + $0x5b0] sm:$0xff]
    %v1144 = vld [vmem:[#allocation6 + $0x5b8] sm:$0xff]
    %v1145 = vld [vmem:[#allocation6 + $0x5c0] sm:$0xff]
    %v1146 = vld [vmem:[#allocation6 + $0x5c8] sm:$0xff]
    %v1147 = vld [vmem:[#allocation6 + $0x5d0] sm:$0xff]
    %v1148 = vld [vmem:[#allocation6 + $0x5d8] sm:$0xff]
    %v1149 = vld [vmem:[#allocation6 + $0x5e0] sm:$0xff]
    %v1150 = vld [vmem:[#allocation6 + $0x5e8] sm:$0xff]
    %v1151 = vld [vmem:[#allocation6 + $0x5f0] sm:$0xff]
    %v1152 = vld [vmem:[#allocation6 + $0x5f8] sm:$0xff]
    %v1153 = vld [vmem:[#allocation6 + $0x600] sm:$0xff]
    %v1154 = vld [vmem:[#allocation6 + $0x608] sm:$0xff]
    %v1155 = vld [vmem:[#allocation6 + $0x610] sm:$0xff]
    %v1156 = vld [vmem:[#allocation6 + $0x618] sm:$0xff]
    %v1157 = vld [vmem:[#allocation6 + $0x620] sm:$0xff]
    %v1158 = vld [vmem:[#allocation6 + $0x628] sm:$0xff]
    %v1159 = vld [vmem:[#allocation6 + $0x630] sm:$0xff]
    %v1160 = vld [vmem:[#allocation6 + $0x638] sm:$0xff]
    %v1161 = vld [vmem:[#allocation6 + $0x640] sm:$0xff]
    %v1162 = vld [vmem:[#allocation6 + $0x648] sm:$0xff]
    %v1163 = vld [vmem:[#allocation6 + $0x650] sm:$0xff]
    %v1164 = vld [vmem:[#allocation6 + $0x658] sm:$0xff]
    %v1165 = vld [vmem:[#allocation6 + $0x660] sm:$0xff]
    %v1166 = vld [vmem:[#allocation6 + $0x668] sm:$0xff]
    %v1167 = vld [vmem:[#allocation6 + $0x670] sm:$0xff]
    %v1168 = vld [vmem:[#allocation6 + $0x678] sm:$0xff]
    %v1169 = vld [vmem:[#allocation6 + $0x680] sm:$0xff]
    %v1170 = vld [vmem:[#allocation6 + $0x688] sm:$0xff]
    %v1171 = vld [vmem:[#allocation6 + $0x690] sm:$0xff]
    %v1172 = vld [vmem:[#allocation6 + $0x698] sm:$0xff]
    %v1173 = vld [vmem:[#allocation6 + $0x6a0] sm:$0xff]
    %v1174 = vld [vmem:[#allocation6 + $0x6a8] sm:$0xff]
    %v1175 = vld [vmem:[#allocation6 + $0x6b0] sm:$0xff]
    %v1176 = vld [vmem:[#allocation6 + $0x6b8] sm:$0xff]
    %v1177 = vld [vmem:[#allocation6 + $0x6c0] sm:$0xff]
    %v1178 = vld [vmem:[#allocation6 + $0x6c8] sm:$0xff]
    %v1179 = vld [vmem:[#allocation6 + $0x6d0] sm:$0xff]
    %v1180 = vld [vmem:[#allocation6 + $0x6d8] sm:$0xff]
    %v1181 = vld [vmem:[#allocation6 + $0x6e0] sm:$0xff]
    %v1182 = vld [vmem:[#allocation6 + $0x6e8] sm:$0xff]
    %v1183 = vld [vmem:[#allocation6 + $0x6f0] sm:$0xff]
    %v1184 = vld [vmem:[#allocation6 + $0x6f8] sm:$0xff]
    %v1185 = vld [vmem:[#allocation6 + $0x700] sm:$0xff]
    %v1186 = vld [vmem:[#allocation6 + $0x708] sm:$0xff]
    %v1187 = vld [vmem:[#allocation6 + $0x710] sm:$0xff]
    %v1188 = vld [vmem:[#allocation6 + $0x718] sm:$0xff]
    %v1189 = vld [vmem:[#allocation6 + $0x720] sm:$0xff]
    %v1190 = vld [vmem:[#allocation6 + $0x728] sm:$0xff]
    %v1191 = vld [vmem:[#allocation6 + $0x730] sm:$0xff]
    %v1192 = vld [vmem:[#allocation6 + $0x738] sm:$0xff]
    %v1193 = vld [vmem:[#allocation6 + $0x740] sm:$0xff]
    %v1194 = vld [vmem:[#allocation6 + $0x748] sm:$0xff]
    %v1195 = vld [vmem:[#allocation6 + $0x750] sm:$0xff]
    %v1196 = vld [vmem:[#allocation6 + $0x758] sm:$0xff]
    %v1197 = vld [vmem:[#allocation6 + $0x760] sm:$0xff]
    %v1198 = vld [vmem:[#allocation6 + $0x768] sm:$0xff]
    %v1199 = vld [vmem:[#allocation6 + $0x770] sm:$0xff]
    %v1200 = vld [vmem:[#allocation6 + $0x778] sm:$0xff]
    %v1201 = vld [vmem:[#allocation6 + $0x780] sm:$0xff]
    %v1202 = vld [vmem:[#allocation6 + $0x788] sm:$0xff]
    %v1203 = vld [vmem:[#allocation6 + $0x790] sm:$0xff]
    %v1204 = vld [vmem:[#allocation6 + $0x798] sm:$0xff]
    %v1205 = vld [vmem:[#allocation6 + $0x7a0] sm:$0xff]
    %v1206 = vld [vmem:[#allocation6 + $0x7a8] sm:$0xff]
    %v1207 = vld [vmem:[#allocation6 + $0x7b0] sm:$0xff]
    %v1208 = vld [vmem:[#allocation6 + $0x7b8] sm:$0xff]
    %v1209 = vld [vmem:[#allocation6 + $0x7c0] sm:$0xff]
    %v1210 = vld [vmem:[#allocation6 + $0x7c8] sm:$0xff]
    %v1211 = vld [vmem:[#allocation6 + $0x7d0] sm:$0xff]
    %v1212 = vld [vmem:[#allocation6 + $0x7d8] sm:$0xff]
    %v1213 = vld [vmem:[#allocation6 + $0x7e0] sm:$0xff]
    %v1214 = vld [vmem:[#allocation6 + $0x7e8] sm:$0xff]
    %v1215 = vld [vmem:[#allocation6 + $0x7f0] sm:$0xff]
    %v1216 = vld [vmem:[#allocation6 + $0x7f8] sm:$0xff]
    %v1217 = vld [vmem:[#allocation6 + $0x800] sm:$0xff]
    %v1218 = vld [vmem:[#allocation6 + $0x808] sm:$0xff]
    %v1219 = vld [vmem:[#allocation6 + $0x810] sm:$0xff]
    %v1220 = vld [vmem:[#allocation6 + $0x818] sm:$0xff]
    %v1221 = vld [vmem:[#allocation6 + $0x820] sm:$0xff]
    %v1222 = vld [vmem:[#allocation6 + $0x828] sm:$0xff]
    %v1223 = vld [vmem:[#allocation6 + $0x830] sm:$0xff]
    %v1224 = vld [vmem:[#allocation6 + $0x838] sm:$0xff]
    %v1225 = vld [vmem:[#allocation6 + $0x840] sm:$0xff]
    %v1226 = vld [vmem:[#allocation6 + $0x848] sm:$0xff]
    %v1227 = vld [vmem:[#allocation6 + $0x850] sm:$0xff]
    %v1228 = vld [vmem:[#allocation6 + $0x858] sm:$0xff]
    %v1229 = vld [vmem:[#allocation6 + $0x860] sm:$0xff]
    %v1230 = vld [vmem:[#allocation6 + $0x868] sm:$0xff]
    %v1231 = vld [vmem:[#allocation6 + $0x870] sm:$0xff]
    %v1232 = vld [vmem:[#allocation6 + $0x878] sm:$0xff]
    %v1233 = vld [vmem:[#allocation6 + $0x880] sm:$0xff]
    %v1234 = vld [vmem:[#allocation6 + $0x888] sm:$0xff]
    %v1235 = vld [vmem:[#allocation6 + $0x890] sm:$0xff]
    %v1236 = vld [vmem:[#allocation6 + $0x898] sm:$0xff]
    %v1237 = vld [vmem:[#allocation6 + $0x8a0] sm:$0xff]
    %v1238 = vld [vmem:[#allocation6 + $0x8a8] sm:$0xff]
    %v1239 = vld [vmem:[#allocation6 + $0x8b0] sm:$0xff]
    %v1240 = vld [vmem:[#allocation6 + $0x8b8] sm:$0xff]
    %v1241 = vld [vmem:[#allocation6 + $0x8c0] sm:$0xff]
    %v1242 = vld [vmem:[#allocation6 + $0x8c8] sm:$0xff]
    %v1243 = vld [vmem:[#allocation6 + $0x8d0] sm:$0xff]
    %v1244 = vld [vmem:[#allocation6 + $0x8d8] sm:$0xff]
    %v1245 = vld [vmem:[#allocation6 + $0x8e0] sm:$0xff]
    %v1246 = vld [vmem:[#allocation6 + $0x8e8] sm:$0xff]
    %v1247 = vld [vmem:[#allocation6 + $0x8f0] sm:$0xff]
    %v1248 = vld [vmem:[#allocation6 + $0x8f8] sm:$0xff]
    %v1249 = vld [vmem:[#allocation6 + $0x900] sm:$0xff]
    %v1250 = vld [vmem:[#allocation6 + $0x908] sm:$0xff]
    %v1251 = vld [vmem:[#allocation6 + $0x910] sm:$0xff]
    %v1252 = vld [vmem:[#allocation6 + $0x918] sm:$0xff]
    %v1253 = vld [vmem:[#allocation6 + $0x920] sm:$0xff]
    %v1254 = vld [vmem:[#allocation6 + $0x928] sm:$0xff]
    %v1255 = vld [vmem:[#allocation6 + $0x930] sm:$0xff]
    %v1256 = vld [vmem:[#allocation6 + $0x938] sm:$0xff]
    %v1257 = vld [vmem:[#allocation6 + $0x940] sm:$0xff]
    %v1258 = vld [vmem:[#allocation6 + $0x948] sm:$0xff]
    %v1259 = vld [vmem:[#allocation6 + $0x950] sm:$0xff]
    %v1260 = vld [vmem:[#allocation6 + $0x958] sm:$0xff]
    %v1261 = vld [vmem:[#allocation6 + $0x960] sm:$0xff]
    %v1262 = vld [vmem:[#allocation6 + $0x968] sm:$0xff]
    %v1263 = vld [vmem:[#allocation6 + $0x970] sm:$0xff]
    %v1264 = vld [vmem:[#allocation6 + $0x978] sm:$0xff]
    %v1265 = vld [vmem:[#allocation6 + $0x980] sm:$0xff]
    %v1266 = vld [vmem:[#allocation6 + $0x988] sm:$0xff]
    %v1267 = vld [vmem:[#allocation6 + $0x990] sm:$0xff]
    %v1268 = vld [vmem:[#allocation6 + $0x998] sm:$0xff]
    %v1269 = vld [vmem:[#allocation6 + $0x9a0] sm:$0xff]
    %v1270 = vld [vmem:[#allocation6 + $0x9a8] sm:$0xff]
    %v1271 = vld [vmem:[#allocation6 + $0x9b0] sm:$0xff]
    %v1272 = vld [vmem:[#allocation6 + $0x9b8] sm:$0xff]
    %v1273 = vld [vmem:[#allocation6 + $0x9c0] sm:$0xff]
    %v1274 = vld [vmem:[#allocation6 + $0x9c8] sm:$0xff]
    %v1275 = vld [vmem:[#allocation6 + $0x9d0] sm:$0xff]
    %v1276 = vld [vmem:[#allocation6 + $0x9d8] sm:$0xff]
    %v1277 = vld [vmem:[#allocation6 + $0x9e0] sm:$0xff]
    %v1278 = vld [vmem:[#allocation6 + $0x9e8] sm:$0xff]
    %v1279 = vld [vmem:[#allocation6 + $0x9f0] sm:$0xff]
    %v1280 = vld [vmem:[#allocation6 + $0x9f8] sm:$0xff]
    %v1281 = vld [vmem:[#allocation6 + $0xa00] sm:$0xff]
    %v1282 = vld [vmem:[#allocation6 + $0xa08] sm:$0xff]
    %v1283 = vld [vmem:[#allocation6 + $0xa10] sm:$0xff]
    %v1284 = vld [vmem:[#allocation6 + $0xa18] sm:$0xff]
    %v1285 = vld [vmem:[#allocation6 + $0xa20] sm:$0xff]
    %v1286 = vld [vmem:[#allocation6 + $0xa28] sm:$0xff]
    %v1287 = vld [vmem:[#allocation6 + $0xa30] sm:$0xff]
    %v1288 = vld [vmem:[#allocation6 + $0xa38] sm:$0xff]
    %v1289 = vld [vmem:[#allocation6 + $0xa40] sm:$0xff]
    %v1290 = vld [vmem:[#allocation6 + $0xa48] sm:$0xff]
    %v1291 = vld [vmem:[#allocation6 + $0xa50] sm:$0xff]
    %v1292 = vld [vmem:[#allocation6 + $0xa58] sm:$0xff]
    %v1293 = vld [vmem:[#allocation6 + $0xa60] sm:$0xff]
    %v1294 = vld [vmem:[#allocation6 + $0xa68] sm:$0xff]
    %v1295 = vld [vmem:[#allocation6 + $0xa70] sm:$0xff]
    %v1296 = vld [vmem:[#allocation6 + $0xa78] sm:$0xff]
    %v1297 = vld [vmem:[#allocation6 + $0xa80] sm:$0xff]
    %v1298 = vld [vmem:[#allocation6 + $0xa88] sm:$0xff]
    %v1299 = vld [vmem:[#allocation6 + $0xa90] sm:$0xff]
    %v1300 = vld [vmem:[#allocation6 + $0xa98] sm:$0xff]
    %v1301 = vld [vmem:[#allocation6 + $0xaa0] sm:$0xff]
    %v1302 = vld [vmem:[#allocation6 + $0xaa8] sm:$0xff]
    %v1303 = vld [vmem:[#allocation6 + $0xab0] sm:$0xff]
    %v1304 = vld [vmem:[#allocation6 + $0xab8] sm:$0xff]
    %v1305 = vld [vmem:[#allocation6 + $0xac0] sm:$0xff]
    %v1306 = vld [vmem:[#allocation6 + $0xac8] sm:$0xff]
    %v1307 = vld [vmem:[#allocation6 + $0xad0] sm:$0xff]
    %v1308 = vld [vmem:[#allocation6 + $0xad8] sm:$0xff]
    %v1309 = vld [vmem:[#allocation6 + $0xae0] sm:$0xff]
    %v1310 = vld [vmem:[#allocation6 + $0xae8] sm:$0xff]
    %v1311 = vld [vmem:[#allocation6 + $0xaf0] sm:$0xff]
    %v1312 = vld [vmem:[#allocation6 + $0xaf8] sm:$0xff]
    %v1313 = vld [vmem:[#allocation6 + $0xb00] sm:$0xff]
    %v1314 = vld [vmem:[#allocation6 + $0xb08] sm:$0xff]
    %v1315 = vld [vmem:[#allocation6 + $0xb10] sm:$0xff]
    %v1316 = vld [vmem:[#allocation6 + $0xb18] sm:$0xff]
    %v1317 = vld [vmem:[#allocation6 + $0xb20] sm:$0xff]
    %v1318 = vld [vmem:[#allocation6 + $0xb28] sm:$0xff]
    %v1319 = vld [vmem:[#allocation6 + $0xb30] sm:$0xff]
    %v1320 = vld [vmem:[#allocation6 + $0xb38] sm:$0xff]
    %v1321 = vld [vmem:[#allocation6 + $0xb40] sm:$0xff]
    %v1322 = vld [vmem:[#allocation6 + $0xb48] sm:$0xff]
    %v1323 = vld [vmem:[#allocation6 + $0xb50] sm:$0xff]
    %v1324 = vld [vmem:[#allocation6 + $0xb58] sm:$0xff]
    %v1325 = vld [vmem:[#allocation6 + $0xb60] sm:$0xff]
    %v1326 = vld [vmem:[#allocation6 + $0xb68] sm:$0xff]
    %v1327 = vld [vmem:[#allocation6 + $0xb70] sm:$0xff]
    %v1328 = vld [vmem:[#allocation6 + $0xb78] sm:$0xff]
    %v1329 = vld [vmem:[#allocation6 + $0xb80] sm:$0xff]
    %v1330 = vld [vmem:[#allocation6 + $0xb88] sm:$0xff]
    %v1331 = vld [vmem:[#allocation6 + $0xb90] sm:$0xff]
    %v1332 = vld [vmem:[#allocation6 + $0xb98] sm:$0xff]
    %v1333 = vld [vmem:[#allocation6 + $0xba0] sm:$0xff]
    %v1334 = vld [vmem:[#allocation6 + $0xba8] sm:$0xff]
    %v1335 = vld [vmem:[#allocation6 + $0xbb0] sm:$0xff]
    %v1336 = vld [vmem:[#allocation6 + $0xbb8] sm:$0xff]
    %v1337 = vld [vmem:[#allocation6 + $0xbc0] sm:$0xff]
    %v1338 = vld [vmem:[#allocation6 + $0xbc8] sm:$0xff]
    %v1339 = vld [vmem:[#allocation6 + $0xbd0] sm:$0xff]
    %v1340 = vld [vmem:[#allocation6 + $0xbd8] sm:$0xff]
    %v1341 = vld [vmem:[#allocation6 + $0xbe0] sm:$0xff]
    %v1342 = vld [vmem:[#allocation6 + $0xbe8] sm:$0xff]
    %v1343 = vld [vmem:[#allocation6 + $0xbf0] sm:$0xff]
    %v1344 = vld [vmem:[#allocation6 + $0xbf8] sm:$0xff]
    %v1345 = vld [vmem:[#allocation6 + $0xc00] sm:$0xff]
    %v1346 = vld [vmem:[#allocation6 + $0xc08] sm:$0xff]
    %v1347 = vld [vmem:[#allocation6 + $0xc10] sm:$0xff]
    %v1348 = vld [vmem:[#allocation6 + $0xc18] sm:$0xff]
    %v1349 = vld [vmem:[#allocation6 + $0xc20] sm:$0xff]
    %v1350 = vld [vmem:[#allocation6 + $0xc28] sm:$0xff]
    %v1351 = vld [vmem:[#allocation6 + $0xc30] sm:$0xff]
    %v1352 = vld [vmem:[#allocation6 + $0xc38] sm:$0xff]
    %v1353 = vld [vmem:[#allocation6 + $0xc40] sm:$0xff]
    %v1354 = vld [vmem:[#allocation6 + $0xc48] sm:$0xff]
    %v1355 = vld [vmem:[#allocation6 + $0xc50] sm:$0xff]
    %v1356 = vld [vmem:[#allocation6 + $0xc58] sm:$0xff]
    %v1357 = vld [vmem:[#allocation6 + $0xc60] sm:$0xff]
    %v1358 = vld [vmem:[#allocation6 + $0xc68] sm:$0xff]
    %v1359 = vld [vmem:[#allocation6 + $0xc70] sm:$0xff]
    %v1360 = vld [vmem:[#allocation6 + $0xc78] sm:$0xff]
    %v1361 = vld [vmem:[#allocation6 + $0xc80] sm:$0xff]
    %v1362 = vld [vmem:[#allocation6 + $0xc88] sm:$0xff]
    %v1363 = vld [vmem:[#allocation6 + $0xc90] sm:$0xff]
    %v1364 = vld [vmem:[#allocation6 + $0xc98] sm:$0xff]
    %v1365 = vld [vmem:[#allocation6 + $0xca0] sm:$0xff]
    %v1366 = vld [vmem:[#allocation6 + $0xca8] sm:$0xff]
    %v1367 = vld [vmem:[#allocation6 + $0xcb0] sm:$0xff]
    %v1368 = vld [vmem:[#allocation6 + $0xcb8] sm:$0xff]
    %v1369 = vld [vmem:[#allocation6 + $0xcc0] sm:$0xff]
    %v1370 = vld [vmem:[#allocation6 + $0xcc8] sm:$0xff]
    %v1371 = vld [vmem:[#allocation6 + $0xcd0] sm:$0xff]
    %v1372 = vld [vmem:[#allocation6 + $0xcd8] sm:$0xff]
    %v1373 = vld [vmem:[#allocation6 + $0xce0] sm:$0xff]
    %v1374 = vld [vmem:[#allocation6 + $0xce8] sm:$0xff]
    %v1375 = vld [vmem:[#allocation6 + $0xcf0] sm:$0xff]
    %v1376 = vld [vmem:[#allocation6 + $0xcf8] sm:$0xff]
    %v1377 = vld [vmem:[#allocation6 + $0xd00] sm:$0xff]
    %v1378 = vld [vmem:[#allocation6 + $0xd08] sm:$0xff]
    %v1379 = vld [vmem:[#allocation6 + $0xd10] sm:$0xff]
    %v1380 = vld [vmem:[#allocation6 + $0xd18] sm:$0xff]
    %v1381 = vld [vmem:[#allocation6 + $0xd20] sm:$0xff]
    %v1382 = vld [vmem:[#allocation6 + $0xd28] sm:$0xff]
    %v1383 = vld [vmem:[#allocation6 + $0xd30] sm:$0xff]
    %v1384 = vld [vmem:[#allocation6 + $0xd38] sm:$0xff]
    %v1385 = vld [vmem:[#allocation6 + $0xd40] sm:$0xff]
    %v1386 = vld [vmem:[#allocation6 + $0xd48] sm:$0xff]
    %v1387 = vld [vmem:[#allocation6 + $0xd50] sm:$0xff]
    %v1388 = vld [vmem:[#allocation6 + $0xd58] sm:$0xff]
    %v1389 = vld [vmem:[#allocation6 + $0xd60] sm:$0xff]
    %v1390 = vld [vmem:[#allocation6 + $0xd68] sm:$0xff]
    %v1391 = vld [vmem:[#allocation6 + $0xd70] sm:$0xff]
    %v1392 = vld [vmem:[#allocation6 + $0xd78] sm:$0xff]
    %v1393 = vld [vmem:[#allocation6 + $0xd80] sm:$0xff]
    %v1394 = vld [vmem:[#allocation6 + $0xd88] sm:$0xff]
    %v1395 = vld [vmem:[#allocation6 + $0xd90] sm:$0xff]
    %v1396 = vld [vmem:[#allocation6 + $0xd98] sm:$0xff]
    %v1397 = vld [vmem:[#allocation6 + $0xda0] sm:$0xff]
    %v1398 = vld [vmem:[#allocation6 + $0xda8] sm:$0xff]
    %v1399 = vld [vmem:[#allocation6 + $0xdb0] sm:$0xff]
    %v1400 = vld [vmem:[#allocation6 + $0xdb8] sm:$0xff]
    %v1401 = vld [vmem:[#allocation6 + $0xdc0] sm:$0xff]
    %v1402 = vld [vmem:[#allocation6 + $0xdc8] sm:$0xff]
    %v1403 = vld [vmem:[#allocation6 + $0xdd0] sm:$0xff]
    %v1404 = vld [vmem:[#allocation6 + $0xdd8] sm:$0xff]
    %v1405 = vld [vmem:[#allocation6 + $0xde0] sm:$0xff]
    %v1406 = vld [vmem:[#allocation6 + $0xde8] sm:$0xff]
    %v1407 = vld [vmem:[#allocation6 + $0xdf0] sm:$0xff]
    %v1408 = vld [vmem:[#allocation6 + $0xdf8] sm:$0xff]
    %v1409 = vld [vmem:[#allocation6 + $0xe00] sm:$0xff]
    %v1410 = vld [vmem:[#allocation6 + $0xe08] sm:$0xff]
    %v1411 = vld [vmem:[#allocation6 + $0xe10] sm:$0xff]
    %v1412 = vld [vmem:[#allocation6 + $0xe18] sm:$0xff]
    %v1413 = vld [vmem:[#allocation6 + $0xe20] sm:$0xff]
    %v1414 = vld [vmem:[#allocation6 + $0xe28] sm:$0xff]
    %v1415 = vld [vmem:[#allocation6 + $0xe30] sm:$0xff]
    %v1416 = vld [vmem:[#allocation6 + $0xe38] sm:$0xff]
    %v1417 = vld [vmem:[#allocation6 + $0xe40] sm:$0xff]
    %v1418 = vld [vmem:[#allocation6 + $0xe48] sm:$0xff]
    %v1419 = vld [vmem:[#allocation6 + $0xe50] sm:$0xff]
    %v1420 = vld [vmem:[#allocation6 + $0xe58] sm:$0xff]
    %v1421 = vld [vmem:[#allocation6 + $0xe60] sm:$0xff]
    %v1422 = vld [vmem:[#allocation6 + $0xe68] sm:$0xff]
    %v1423 = vld [vmem:[#allocation6 + $0xe70] sm:$0xff]
    %v1424 = vld [vmem:[#allocation6 + $0xe78] sm:$0xff]
    %v1425 = vld [vmem:[#allocation6 + $0xe80] sm:$0xff]
    %v1426 = vld [vmem:[#allocation6 + $0xe88] sm:$0xff]
    %v1427 = vld [vmem:[#allocation6 + $0xe90] sm:$0xff]
    %v1428 = vld [vmem:[#allocation6 + $0xe98] sm:$0xff]
    %v1429 = vld [vmem:[#allocation6 + $0xea0] sm:$0xff]
    %v1430 = vld [vmem:[#allocation6 + $0xea8] sm:$0xff]
    %v1431 = vld [vmem:[#allocation6 + $0xeb0] sm:$0xff]
    %v1432 = vld [vmem:[#allocation6 + $0xeb8] sm:$0xff]
    %v1433 = vld [vmem:[#allocation6 + $0xec0] sm:$0xff]
    %v1434 = vld [vmem:[#allocation6 + $0xec8] sm:$0xff]
    %v1435 = vld [vmem:[#allocation6 + $0xed0] sm:$0xff]
    %v1436 = vld [vmem:[#allocation6 + $0xed8] sm:$0xff]
    %v1437 = vld [vmem:[#allocation6 + $0xee0] sm:$0xff]
    %v1438 = vld [vmem:[#allocation6 + $0xee8] sm:$0xff]
    %v1439 = vld [vmem:[#allocation6 + $0xef0] sm:$0xff]
    %v1440 = vld [vmem:[#allocation6 + $0xef8] sm:$0xff]
    %v1441 = vld [vmem:[#allocation6 + $0xf00] sm:$0xff]
    %v1442 = vld [vmem:[#allocation6 + $0xf08] sm:$0xff]
    %v1443 = vld [vmem:[#allocation6 + $0xf10] sm:$0xff]
    %v1444 = vld [vmem:[#allocation6 + $0xf18] sm:$0xff]
    %v1445 = vld [vmem:[#allocation6 + $0xf20] sm:$0xff]
    %v1446 = vld [vmem:[#allocation6 + $0xf28] sm:$0xff]
    %v1447 = vld [vmem:[#allocation6 + $0xf30] sm:$0xff]
    %v1448 = vld [vmem:[#allocation6 + $0xf38] sm:$0xff]
    %v1449 = vld [vmem:[#allocation6 + $0xf40] sm:$0xff]
    %v1450 = vld [vmem:[#allocation6 + $0xf48] sm:$0xff]
    %v1451 = vld [vmem:[#allocation6 + $0xf50] sm:$0xff]
    %v1452 = vld [vmem:[#allocation6 + $0xf58] sm:$0xff]
    %v1453 = vld [vmem:[#allocation6 + $0xf60] sm:$0xff]
    %v1454 = vld [vmem:[#allocation6 + $0xf68] sm:$0xff]
    %v1455 = vld [vmem:[#allocation6 + $0xf70] sm:$0xff]
    %v1456 = vld [vmem:[#allocation6 + $0xf78] sm:$0xff]
    %v1457 = vld [vmem:[#allocation6 + $0xf80] sm:$0xff]
    %v1458 = vld [vmem:[#allocation6 + $0xf88] sm:$0xff]
    %v1459 = vld [vmem:[#allocation6 + $0xf90] sm:$0xff]
    %v1460 = vld [vmem:[#allocation6 + $0xf98] sm:$0xff]
    %v1461 = vld [vmem:[#allocation6 + $0xfa0] sm:$0xff]
    %v1462 = vld [vmem:[#allocation6 + $0xfa8] sm:$0xff]
    %v1463 = vld [vmem:[#allocation6 + $0xfb0] sm:$0xff]
    %v1464 = vld [vmem:[#allocation6 + $0xfb8] sm:$0xff]
    %v1465 = vld [vmem:[#allocation6 + $0xfc0] sm:$0xff]
    %v1466 = vld [vmem:[#allocation6 + $0xfc8] sm:$0xff]
    %v1467 = vld [vmem:[#allocation6 + $0xfd0] sm:$0xff]
    %v1468 = vld [vmem:[#allocation6 + $0xfd8] sm:$0xff]
    %v1469 = vld [vmem:[#allocation6 + $0xfe0] sm:$0xff]
    %v1470 = vld [vmem:[#allocation6 + $0xfe8] sm:$0xff]
    %v1471 = vld [vmem:[#allocation6 + $0xff0] sm:$0xff]
    %v1472 = vld [vmem:[#allocation6 + $0xff8] sm:$0xff]
    %v1473 = vld [vmem:[#allocation8] sm:$0x3]
    %v1475 = vlaneseq
    %v1476 = vshrl.u32 %v1475, 7
    %v1477 = vsub.s32 0, %v1476
    %v1478 = vrot.slane %v1473, %v1477
    %v1479 = vlaneseq
    %v1480 = vshrl.u32 %v1479, 7
    %v1481 = vsub.s32 1, %v1480
    %v1482 = vrot.slane %v1473, %v1481
    %vm1517 = vcmask 1041409
    %v1518 = vsel %vm1517, %v930, %v898
    %v1519 = vsel %vm1517, %v932, %v900
    %v1520 = vsel %vm1517, %v934, %v902
    %v1521 = vsel %vm1517, %v936, %v904
    %v1522 = vsel %vm1517, %v938, %v906
    %v1523 = vsel %vm1517, %v940, %v908
    %v1524 = vsel %vm1517, %v942, %v910
    %v1525 = vsel %vm1517, %v944, %v912
    %v1526 = vsel %vm1517, %v946, %v914
    %v1527 = vsel %vm1517, %v948, %v916
    %v1528 = vsel %vm1517, %v950, %v918
    %v1529 = vsel %vm1517, %v952, %v920
    %v1530 = vsel %vm1517, %v954, %v922
    %v1531 = vsel %vm1517, %v956, %v924
    %v1532 = vsel %vm1517, %v958, %v926
    %v1533 = vsel %vm1517, %v960, %v928
    %1550 = vmatprep.subr.mxu0 %v962
    %1551 = vmatpush1.msra.mxu0 %v961
    %1552 = vmatprep.subr.mxu0 %v964
    %1553 = vmatpush1.msra.mxu0 %v963
    %1554 = vmatprep.subr.mxu0 %v966
    %1555 = vmatpush1.msra.mxu0 %v965
    %1556 = vmatprep.subr.mxu0 %v968
    %1557 = vmatpush1.msra.mxu0 %v967
    %1558 = vmatprep.subr.mxu0 %v970
    %1559 = vmatpush1.msra.mxu0 %v969
    %1560 = vmatprep.subr.mxu0 %v972
    %1561 = vmatpush1.msra.mxu0 %v971
    %1562 = vmatprep.subr.mxu0 %v974
    %1563 = vmatpush1.msra.mxu0 %v973
    %1564 = vmatprep.subr.mxu0 %v976
    %1565 = vmatpush1.msra.mxu0 %v975
    %1566 = vmatprep.subr.mxu0 %v978
    %1567 = vmatpush1.msra.mxu0 %v977
    %1568 = vmatprep.subr.mxu0 %v980
    %1569 = vmatpush1.msra.mxu0 %v979
    %1570 = vmatprep.subr.mxu0 %v982
    %1571 = vmatpush1.msra.mxu0 %v981
    %1572 = vmatprep.subr.mxu0 %v984
    %1573 = vmatpush1.msra.mxu0 %v983
    %1574 = vmatprep.subr.mxu0 %v986
    %1575 = vmatpush1.msra.mxu0 %v985
    %1576 = vmatprep.subr.mxu0 %v988
    %1577 = vmatpush1.msra.mxu0 %v987
    %1578 = vmatprep.subr.mxu0 %v990
    %1579 = vmatpush1.msra.mxu0 %v989
    %1580 = vmatprep.subr.mxu0 %v992
    %1581 = vmatpush1.msra.mxu0 %v991
    %1582 = vmatprep.subr.mxu0 %v994
    %1583 = vmatpush1.msra.mxu0 %v993
    %1584 = vmatprep.subr.mxu0 %v996
    %1585 = vmatpush1.msra.mxu0 %v995
    %1586 = vmatprep.subr.mxu0 %v998
    %1587 = vmatpush1.msra.mxu0 %v997
    %1588 = vmatprep.subr.mxu0 %v1000
    %1589 = vmatpush1.msra.mxu0 %v999
    %1590 = vmatprep.subr.mxu0 %v1002
    %1591 = vmatpush1.msra.mxu0 %v1001
    %1592 = vmatprep.subr.mxu0 %v1004
    %1593 = vmatpush1.msra.mxu0 %v1003
    %1594 = vmatprep.subr.mxu0 %v1006
    %1595 = vmatpush1.msra.mxu0 %v1005
    %1596 = vmatprep.subr.mxu0 %v1008
    %1597 = vmatpush1.msra.mxu0 %v1007
    %1598 = vmatprep.subr.mxu0 %v1010
    %1599 = vmatpush1.msra.mxu0 %v1009
    %1600 = vmatprep.subr.mxu0 %v1012
    %1601 = vmatpush1.msra.mxu0 %v1011
    %1602 = vmatprep.subr.mxu0 %v1014
    %1603 = vmatpush1.msra.mxu0 %v1013
    %1604 = vmatprep.subr.mxu0 %v1016
    %1605 = vmatpush1.msra.mxu0 %v1015
    %1606 = vmatprep.subr.mxu0 %v1018
    %1607 = vmatpush1.msra.mxu0 %v1017
    %1608 = vmatprep.subr.mxu0 %v1020
    %1609 = vmatpush1.msra.mxu0 %v1019
    %1610 = vmatprep.subr.mxu0 %v1022
    %1611 = vmatpush1.msra.mxu0 %v1021
    %1612 = vmatprep.subr.mxu0 %v1024
    %1613 = vmatpush1.msra.mxu0 %v1023
    %1614 = vmatprep.mubr.f32.mxu0 %v1519
    %1615 = vmatmul.mubr.f32.gmra.mrb[0].mxu0 %v1518
    %v1616 = vpop.f32.mrb[0].mxu0
    %v1617 = vadd.f32 %v1478, %v1616
    %v1618 = vpop.f32.mrb[0].mxu0
    %v1619 = vadd.f32 %v1482, %v1618
    %1620 = vdwg.mxu0
    %1621 = vmatprep.subr.mxu0 %v1026
    %1622 = vmatpush1.msra.mxu0 %v1025
    %1623 = vmatprep.subr.mxu0 %v1028
    %1624 = vmatpush1.msra.mxu0 %v1027
    %1625 = vmatprep.subr.mxu0 %v1030
    %1626 = vmatpush1.msra.mxu0 %v1029
    %1627 = vmatprep.subr.mxu0 %v1032
    %1628 = vmatpush1.msra.mxu0 %v1031
    %1629 = vmatprep.subr.mxu0 %v1034
    %1630 = vmatpush1.msra.mxu0 %v1033
    %1631 = vmatprep.subr.mxu0 %v1036
    %1632 = vmatpush1.msra.mxu0 %v1035
    %1633 = vmatprep.subr.mxu0 %v1038
    %1634 = vmatpush1.msra.mxu0 %v1037
    %1635 = vmatprep.subr.mxu0 %v1040
    %1636 = vmatpush1.msra.mxu0 %v1039
    %1637 = vmatprep.subr.mxu0 %v1042
    %1638 = vmatpush1.msra.mxu0 %v1041
    %1639 = vmatprep.subr.mxu0 %v1044
    %1640 = vmatpush1.msra.mxu0 %v1043
    %1641 = vmatprep.subr.mxu0 %v1046
    %1642 = vmatpush1.msra.mxu0 %v1045
    %1643 = vmatprep.subr.mxu0 %v1048
    %1644 = vmatpush1.msra.mxu0 %v1047
    %1645 = vmatprep.subr.mxu0 %v1050
    %1646 = vmatpush1.msra.mxu0 %v1049
    %1647 = vmatprep.subr.mxu0 %v1052
    %1648 = vmatpush1.msra.mxu0 %v1051
    %1649 = vmatprep.subr.mxu0 %v1054
    %1650 = vmatpush1.msra.mxu0 %v1053
    %1651 = vmatprep.subr.mxu0 %v1056
    %1652 = vmatpush1.msra.mxu0 %v1055
    %1653 = vmatprep.subr.mxu0 %v1058
    %1654 = vmatpush1.msra.mxu0 %v1057
    %1655 = vmatprep.subr.mxu0 %v1060
    %1656 = vmatpush1.msra.mxu0 %v1059
    %1657 = vmatprep.subr.mxu0 %v1062
    %1658 = vmatpush1.msra.mxu0 %v1061
    %1659 = vmatprep.subr.mxu0 %v1064
    %1660 = vmatpush1.msra.mxu0 %v1063
    %1661 = vmatprep.subr.mxu0 %v1066
    %1662 = vmatpush1.msra.mxu0 %v1065
    %1663 = vmatprep.subr.mxu0 %v1068
    %1664 = vmatpush1.msra.mxu0 %v1067
    %1665 = vmatprep.subr.mxu0 %v1070
    %1666 = vmatpush1.msra.mxu0 %v1069
    %1667 = vmatprep.subr.mxu0 %v1072
    %1668 = vmatpush1.msra.mxu0 %v1071
    %1669 = vmatprep.subr.mxu0 %v1074
    %1670 = vmatpush1.msra.mxu0 %v1073
    %1671 = vmatprep.subr.mxu0 %v1076
    %1672 = vmatpush1.msra.mxu0 %v1075
    %1673 = vmatprep.subr.mxu0 %v1078
    %1674 = vmatpush1.msra.mxu0 %v1077
    %1675 = vmatprep.subr.mxu0 %v1080
    %1676 = vmatpush1.msra.mxu0 %v1079
    %1677 = vmatprep.subr.mxu0 %v1082
    %1678 = vmatpush1.msra.mxu0 %v1081
    %1679 = vmatprep.subr.mxu0 %v1084
    %1680 = vmatpush1.msra.mxu0 %v1083
    %1681 = vmatprep.subr.mxu0 %v1086
    %1682 = vmatpush1.msra.mxu0 %v1085
    %1683 = vmatprep.subr.mxu0 %v1088
    %1684 = vmatpush1.msra.mxu0 %v1087
    %1685 = vmatprep.mubr.f32.mxu0 %v1521
    %1686 = vmatmul.mubr.f32.gmra.mrb[0].mxu0 %v1520
    %v1687 = vpop.f32.mrb[0].mxu0
    %v1688 = vadd.f32 %v1617, %v1687
    %v1689 = vpop.f32.mrb[0].mxu0
    %v1690 = vadd.f32 %v1619, %v1689
    %1691 = vdwg.mxu0
    %1692 = vmatprep.subr.mxu0 %v1090
    %1693 = vmatpush1.msra.mxu0 %v1089
    %1694 = vmatprep.subr.mxu0 %v1092
    %1695 = vmatpush1.msra.mxu0 %v1091
    %1696 = vmatprep.subr.mxu0 %v1094
    %1697 = vmatpush1.msra.mxu0 %v1093
    %1698 = vmatprep.subr.mxu0 %v1096
    %1699 = vmatpush1.msra.mxu0 %v1095
    %1700 = vmatprep.subr.mxu0 %v1098
    %1701 = vmatpush1.msra.mxu0 %v1097
    %1702 = vmatprep.subr.mxu0 %v1100
    %1703 = vmatpush1.msra.mxu0 %v1099
    %1704 = vmatprep.subr.mxu0 %v1102
    %1705 = vmatpush1.msra.mxu0 %v1101
    %1706 = vmatprep.subr.mxu0 %v1104
    %1707 = vmatpush1.msra.mxu0 %v1103
    %1708 = vmatprep.subr.mxu0 %v1106
    %1709 = vmatpush1.msra.mxu0 %v1105
    %1710 = vmatprep.subr.mxu0 %v1108
    %1711 = vmatpush1.msra.mxu0 %v1107
    %1712 = vmatprep.subr.mxu0 %v1110
    %1713 = vmatpush1.msra.mxu0 %v1109
    %1714 = vmatprep.subr.mxu0 %v1112
    %1715 = vmatpush1.msra.mxu0 %v1111
    %1716 = vmatprep.subr.mxu0 %v1114
    %1717 = vmatpush1.msra.mxu0 %v1113
    %1718 = vmatprep.subr.mxu0 %v1116
    %1719 = vmatpush1.msra.mxu0 %v1115
    %1720 = vmatprep.subr.mxu0 %v1118
    %1721 = vmatpush1.msra.mxu0 %v1117
    %1722 = vmatprep.subr.mxu0 %v1120
    %1723 = vmatpush1.msra.mxu0 %v1119
    %1724 = vmatprep.subr.mxu0 %v1122
    %1725 = vmatpush1.msra.mxu0 %v1121
    %1726 = vmatprep.subr.mxu0 %v1124
    %1727 = vmatpush1.msra.mxu0 %v1123
    %1728 = vmatprep.subr.mxu0 %v1126
    %1729 = vmatpush1.msra.mxu0 %v1125
    %1730 = vmatprep.subr.mxu0 %v1128
    %1731 = vmatpush1.msra.mxu0 %v1127
    %1732 = vmatprep.subr.mxu0 %v1130
    %1733 = vmatpush1.msra.mxu0 %v1129
    %1734 = vmatprep.subr.mxu0 %v1132
    %1735 = vmatpush1.msra.mxu0 %v1131
    %1736 = vmatprep.subr.mxu0 %v1134
    %1737 = vmatpush1.msra.mxu0 %v1133
    %1738 = vmatprep.subr.mxu0 %v1136
    %1739 = vmatpush1.msra.mxu0 %v1135
    %1740 = vmatprep.subr.mxu0 %v1138
    %1741 = vmatpush1.msra.mxu0 %v1137
    %1742 = vmatprep.subr.mxu0 %v1140
    %1743 = vmatpush1.msra.mxu0 %v1139
    %1744 = vmatprep.subr.mxu0 %v1142
    %1745 = vmatpush1.msra.mxu0 %v1141
    %1746 = vmatprep.subr.mxu0 %v1144
    %1747 = vmatpush1.msra.mxu0 %v1143
    %1748 = vmatprep.subr.mxu0 %v1146
    %1749 = vmatpush1.msra.mxu0 %v1145
    %1750 = vmatprep.subr.mxu0 %v1148
    %1751 = vmatpush1.msra.mxu0 %v1147
    %1752 = vmatprep.subr.mxu0 %v1150
    %1753 = vmatpush1.msra.mxu0 %v1149
    %1754 = vmatprep.subr.mxu0 %v1152
    %1755 = vmatpush1.msra.mxu0 %v1151
    %1756 = vmatprep.mubr.f32.mxu0 %v1523
    %1757 = vmatmul.mubr.f32.gmra.mrb[0].mxu0 %v1522
    %v1758 = vpop.f32.mrb[0].mxu0
    %v1759 = vadd.f32 %v1688, %v1758
    %v1760 = vpop.f32.mrb[0].mxu0
    %v1761 = vadd.f32 %v1690, %v1760
    %1762 = vdwg.mxu0
    %1763 = vmatprep.subr.mxu0 %v1154
    %1764 = vmatpush1.msra.mxu0 %v1153
    %1765 = vmatprep.subr.mxu0 %v1156
    %1766 = vmatpush1.msra.mxu0 %v1155
    %1767 = vmatprep.subr.mxu0 %v1158
    %1768 = vmatpush1.msra.mxu0 %v1157
    %1769 = vmatprep.subr.mxu0 %v1160
    %1770 = vmatpush1.msra.mxu0 %v1159
    %1771 = vmatprep.subr.mxu0 %v1162
    %1772 = vmatpush1.msra.mxu0 %v1161
    %1773 = vmatprep.subr.mxu0 %v1164
    %1774 = vmatpush1.msra.mxu0 %v1163
    %1775 = vmatprep.subr.mxu0 %v1166
    %1776 = vmatpush1.msra.mxu0 %v1165
    %1777 = vmatprep.subr.mxu0 %v1168
    %1778 = vmatpush1.msra.mxu0 %v1167
    %1779 = vmatprep.subr.mxu0 %v1170
    %1780 = vmatpush1.msra.mxu0 %v1169
    %1781 = vmatprep.subr.mxu0 %v1172
    %1782 = vmatpush1.msra.mxu0 %v1171
    %1783 = vmatprep.subr.mxu0 %v1174
    %1784 = vmatpush1.msra.mxu0 %v1173
    %1785 = vmatprep.subr.mxu0 %v1176
    %1786 = vmatpush1.msra.mxu0 %v1175
    %1787 = vmatprep.subr.mxu0 %v1178
    %1788 = vmatpush1.msra.mxu0 %v1177
    %1789 = vmatprep.subr.mxu0 %v1180
    %1790 = vmatpush1.msra.mxu0 %v1179
    %1791 = vmatprep.subr.mxu0 %v1182
    %1792 = vmatpush1.msra.mxu0 %v1181
    %1793 = vmatprep.subr.mxu0 %v1184
    %1794 = vmatpush1.msra.mxu0 %v1183
    %1795 = vmatprep.subr.mxu0 %v1186
    %1796 = vmatpush1.msra.mxu0 %v1185
    %1797 = vmatprep.subr.mxu0 %v1188
    %1798 = vmatpush1.msra.mxu0 %v1187
    %1799 = vmatprep.subr.mxu0 %v1190
    %1800 = vmatpush1.msra.mxu0 %v1189
    %1801 = vmatprep.subr.mxu0 %v1192
    %1802 = vmatpush1.msra.mxu0 %v1191
    %1803 = vmatprep.subr.mxu0 %v1194
    %1804 = vmatpush1.msra.mxu0 %v1193
    %1805 = vmatprep.subr.mxu0 %v1196
    %1806 = vmatpush1.msra.mxu0 %v1195
    %1807 = vmatprep.subr.mxu0 %v1198
    %1808 = vmatpush1.msra.mxu0 %v1197
    %1809 = vmatprep.subr.mxu0 %v1200
    %1810 = vmatpush1.msra.mxu0 %v1199
    %1811 = vmatprep.subr.mxu0 %v1202
    %1812 = vmatpush1.msra.mxu0 %v1201
    %1813 = vmatprep.subr.mxu0 %v1204
    %1814 = vmatpush1.msra.mxu0 %v1203
    %1815 = vmatprep.subr.mxu0 %v1206
    %1816 = vmatpush1.msra.mxu0 %v1205
    %1817 = vmatprep.subr.mxu0 %v1208
    %1818 = vmatpush1.msra.mxu0 %v1207
    %1819 = vmatprep.subr.mxu0 %v1210
    %1820 = vmatpush1.msra.mxu0 %v1209
    %1821 = vmatprep.subr.mxu0 %v1212
    %1822 = vmatpush1.msra.mxu0 %v1211
    %1823 = vmatprep.subr.mxu0 %v1214
    %1824 = vmatpush1.msra.mxu0 %v1213
    %1825 = vmatprep.subr.mxu0 %v1216
    %1826 = vmatpush1.msra.mxu0 %v1215
    %1827 = vmatprep.mubr.f32.mxu0 %v1525
    %1828 = vmatmul.mubr.f32.gmra.mrb[0].mxu0 %v1524
    %v1829 = vpop.f32.mrb[0].mxu0
    %v1830 = vadd.f32 %v1759, %v1829
    %v1831 = vpop.f32.mrb[0].mxu0
    %v1832 = vadd.f32 %v1761, %v1831
    %1833 = vdwg.mxu0
    %1834 = vmatprep.subr.mxu0 %v1218
    %1835 = vmatpush1.msra.mxu0 %v1217
    %1836 = vmatprep.subr.mxu0 %v1220
    %1837 = vmatpush1.msra.mxu0 %v1219
    %1838 = vmatprep.subr.mxu0 %v1222
    %1839 = vmatpush1.msra.mxu0 %v1221
    %1840 = vmatprep.subr.mxu0 %v1224
    %1841 = vmatpush1.msra.mxu0 %v1223
    %1842 = vmatprep.subr.mxu0 %v1226
    %1843 = vmatpush1.msra.mxu0 %v1225
    %1844 = vmatprep.subr.mxu0 %v1228
    %1845 = vmatpush1.msra.mxu0 %v1227
    %1846 = vmatprep.subr.mxu0 %v1230
    %1847 = vmatpush1.msra.mxu0 %v1229
    %1848 = vmatprep.subr.mxu0 %v1232
    %1849 = vmatpush1.msra.mxu0 %v1231
    %1850 = vmatprep.subr.mxu0 %v1234
    %1851 = vmatpush1.msra.mxu0 %v1233
    %1852 = vmatprep.subr.mxu0 %v1236
    %1853 = vmatpush1.msra.mxu0 %v1235
    %1854 = vmatprep.subr.mxu0 %v1238
    %1855 = vmatpush1.msra.mxu0 %v1237
    %1856 = vmatprep.subr.mxu0 %v1240
    %1857 = vmatpush1.msra.mxu0 %v1239
    %1858 = vmatprep.subr.mxu0 %v1242
    %1859 = vmatpush1.msra.mxu0 %v1241
    %1860 = vmatprep.subr.mxu0 %v1244
    %1861 = vmatpush1.msra.mxu0 %v1243
    %1862 = vmatprep.subr.mxu0 %v1246
    %1863 = vmatpush1.msra.mxu0 %v1245
    %1864 = vmatprep.subr.mxu0 %v1248
    %1865 = vmatpush1.msra.mxu0 %v1247
    %1866 = vmatprep.subr.mxu0 %v1250
    %1867 = vmatpush1.msra.mxu0 %v1249
    %1868 = vmatprep.subr.mxu0 %v1252
    %1869 = vmatpush1.msra.mxu0 %v1251
    %1870 = vmatprep.subr.mxu0 %v1254
    %1871 = vmatpush1.msra.mxu0 %v1253
    %1872 = vmatprep.subr.mxu0 %v1256
    %1873 = vmatpush1.msra.mxu0 %v1255
    %1874 = vmatprep.subr.mxu0 %v1258
    %1875 = vmatpush1.msra.mxu0 %v1257
    %1876 = vmatprep.subr.mxu0 %v1260
    %1877 = vmatpush1.msra.mxu0 %v1259
    %1878 = vmatprep.subr.mxu0 %v1262
    %1879 = vmatpush1.msra.mxu0 %v1261
    %1880 = vmatprep.subr.mxu0 %v1264
    %1881 = vmatpush1.msra.mxu0 %v1263
    %1882 = vmatprep.subr.mxu0 %v1266
    %1883 = vmatpush1.msra.mxu0 %v1265
    %1884 = vmatprep.subr.mxu0 %v1268
    %1885 = vmatpush1.msra.mxu0 %v1267
    %1886 = vmatprep.subr.mxu0 %v1270
    %1887 = vmatpush1.msra.mxu0 %v1269
    %1888 = vmatprep.subr.mxu0 %v1272
    %1889 = vmatpush1.msra.mxu0 %v1271
    %1890 = vmatprep.subr.mxu0 %v1274
    %1891 = vmatpush1.msra.mxu0 %v1273
    %1892 = vmatprep.subr.mxu0 %v1276
    %1893 = vmatpush1.msra.mxu0 %v1275
    %1894 = vmatprep.subr.mxu0 %v1278
    %1895 = vmatpush1.msra.mxu0 %v1277
    %1896 = vmatprep.subr.mxu0 %v1280
    %1897 = vmatpush1.msra.mxu0 %v1279
    %1898 = vmatprep.mubr.f32.mxu0 %v1527
    %1899 = vmatmul.mubr.f32.gmra.mrb[0].mxu0 %v1526
    %v1900 = vpop.f32.mrb[0].mxu0
    %v1901 = vadd.f32 %v1830, %v1900
    %v1902 = vpop.f32.mrb[0].mxu0
    %v1903 = vadd.f32 %v1832, %v1902
    %1904 = vdwg.mxu0
    %1905 = vmatprep.subr.mxu0 %v1282
    %1906 = vmatpush1.msra.mxu0 %v1281
    %1907 = vmatprep.subr.mxu0 %v1284
    %1908 = vmatpush1.msra.mxu0 %v1283
    %1909 = vmatprep.subr.mxu0 %v1286
    %1910 = vmatpush1.msra.mxu0 %v1285
    %1911 = vmatprep.subr.mxu0 %v1288
    %1912 = vmatpush1.msra.mxu0 %v1287
    %1913 = vmatprep.subr.mxu0 %v1290
    %1914 = vmatpush1.msra.mxu0 %v1289
    %1915 = vmatprep.subr.mxu0 %v1292
    %1916 = vmatpush1.msra.mxu0 %v1291
    %1917 = vmatprep.subr.mxu0 %v1294
    %1918 = vmatpush1.msra.mxu0 %v1293
    %1919 = vmatprep.subr.mxu0 %v1296
    %1920 = vmatpush1.msra.mxu0 %v1295
    %1921 = vmatprep.subr.mxu0 %v1298
    %1922 = vmatpush1.msra.mxu0 %v1297
    %1923 = vmatprep.subr.mxu0 %v1300
    %1924 = vmatpush1.msra.mxu0 %v1299
    %1925 = vmatprep.subr.mxu0 %v1302
    %1926 = vmatpush1.msra.mxu0 %v1301
    %1927 = vmatprep.subr.mxu0 %v1304
    %1928 = vmatpush1.msra.mxu0 %v1303
    %1929 = vmatprep.subr.mxu0 %v1306
    %1930 = vmatpush1.msra.mxu0 %v1305
    %1931 = vmatprep.subr.mxu0 %v1308
    %1932 = vmatpush1.msra.mxu0 %v1307
    %1933 = vmatprep.subr.mxu0 %v1310
    %1934 = vmatpush1.msra.mxu0 %v1309
    %1935 = vmatprep.subr.mxu0 %v1312
    %1936 = vmatpush1.msra.mxu0 %v1311
    %1937 = vmatprep.subr.mxu0 %v1314
    %1938 = vmatpush1.msra.mxu0 %v1313
    %1939 = vmatprep.subr.mxu0 %v1316
    %1940 = vmatpush1.msra.mxu0 %v1315
    %1941 = vmatprep.subr.mxu0 %v1318
    %1942 = vmatpush1.msra.mxu0 %v1317
    %1943 = vmatprep.subr.mxu0 %v1320
    %1944 = vmatpush1.msra.mxu0 %v1319
    %1945 = vmatprep.subr.mxu0 %v1322
    %1946 = vmatpush1.msra.mxu0 %v1321
    %1947 = vmatprep.subr.mxu0 %v1324
    %1948 = vmatpush1.msra.mxu0 %v1323
    %1949 = vmatprep.subr.mxu0 %v1326
    %1950 = vmatpush1.msra.mxu0 %v1325
    %1951 = vmatprep.subr.mxu0 %v1328
    %1952 = vmatpush1.msra.mxu0 %v1327
    %1953 = vmatprep.subr.mxu0 %v1330
    %1954 = vmatpush1.msra.mxu0 %v1329
    %1955 = vmatprep.subr.mxu0 %v1332
    %1956 = vmatpush1.msra.mxu0 %v1331
    %1957 = vmatprep.subr.mxu0 %v1334
    %1958 = vmatpush1.msra.mxu0 %v1333
    %1959 = vmatprep.subr.mxu0 %v1336
    %1960 = vmatpush1.msra.mxu0 %v1335
    %1961 = vmatprep.subr.mxu0 %v1338
    %1962 = vmatpush1.msra.mxu0 %v1337
    %1963 = vmatprep.subr.mxu0 %v1340
    %1964 = vmatpush1.msra.mxu0 %v1339
    %1965 = vmatprep.subr.mxu0 %v1342
    %1966 = vmatpush1.msra.mxu0 %v1341
    %1967 = vmatprep.subr.mxu0 %v1344
    %1968 = vmatpush1.msra.mxu0 %v1343
    %1969 = vmatprep.mubr.f32.mxu0 %v1529
    %1970 = vmatmul.mubr.f32.gmra.mrb[0].mxu0 %v1528
    %v1971 = vpop.f32.mrb[0].mxu0
    %v1972 = vadd.f32 %v1901, %v1971
    %v1973 = vpop.f32.mrb[0].mxu0
    %v1974 = vadd.f32 %v1903, %v1973
    %1975 = vdwg.mxu0
    %1976 = vmatprep.subr.mxu0 %v1346
    %1977 = vmatpush1.msra.mxu0 %v1345
    %1978 = vmatprep.subr.mxu0 %v1348
    %1979 = vmatpush1.msra.mxu0 %v1347
    %1980 = vmatprep.subr.mxu0 %v1350
    %1981 = vmatpush1.msra.mxu0 %v1349
    %1982 = vmatprep.subr.mxu0 %v1352
    %1983 = vmatpush1.msra.mxu0 %v1351
    %1984 = vmatprep.subr.mxu0 %v1354
    %1985 = vmatpush1.msra.mxu0 %v1353
    %1986 = vmatprep.subr.mxu0 %v1356
    %1987 = vmatpush1.msra.mxu0 %v1355
    %1988 = vmatprep.subr.mxu0 %v1358
    %1989 = vmatpush1.msra.mxu0 %v1357
    %1990 = vmatprep.subr.mxu0 %v1360
    %1991 = vmatpush1.msra.mxu0 %v1359
    %1992 = vmatprep.subr.mxu0 %v1362
    %1993 = vmatpush1.msra.mxu0 %v1361
    %1994 = vmatprep.subr.mxu0 %v1364
    %1995 = vmatpush1.msra.mxu0 %v1363
    %1996 = vmatprep.subr.mxu0 %v1366
    %1997 = vmatpush1.msra.mxu0 %v1365
    %1998 = vmatprep.subr.mxu0 %v1368
    %1999 = vmatpush1.msra.mxu0 %v1367
    %2000 = vmatprep.subr.mxu0 %v1370
    %2001 = vmatpush1.msra.mxu0 %v1369
    %2002 = vmatprep.subr.mxu0 %v1372
    %2003 = vmatpush1.msra.mxu0 %v1371
    %2004 = vmatprep.subr.mxu0 %v1374
    %2005 = vmatpush1.msra.mxu0 %v1373
    %2006 = vmatprep.subr.mxu0 %v1376
    %2007 = vmatpush1.msra.mxu0 %v1375
    %2008 = vmatprep.subr.mxu0 %v1378
    %2009 = vmatpush1.msra.mxu0 %v1377
    %2010 = vmatprep.subr.mxu0 %v1380
    %2011 = vmatpush1.msra.mxu0 %v1379
    %2012 = vmatprep.subr.mxu0 %v1382
    %2013 = vmatpush1.msra.mxu0 %v1381
    %2014 = vmatprep.subr.mxu0 %v1384
    %2015 = vmatpush1.msra.mxu0 %v1383
    %2016 = vmatprep.subr.mxu0 %v1386
    %2017 = vmatpush1.msra.mxu0 %v1385
    %2018 = vmatprep.subr.mxu0 %v1388
    %2019 = vmatpush1.msra.mxu0 %v1387
    %2020 = vmatprep.subr.mxu0 %v1390
    %2021 = vmatpush1.msra.mxu0 %v1389
    %2022 = vmatprep.subr.mxu0 %v1392
    %2023 = vmatpush1.msra.mxu0 %v1391
    %2024 = vmatprep.subr.mxu0 %v1394
    %2025 = vmatpush1.msra.mxu0 %v1393
    %2026 = vmatprep.subr.mxu0 %v1396
    %2027 = vmatpush1.msra.mxu0 %v1395
    %2028 = vmatprep.subr.mxu0 %v1398
    %2029 = vmatpush1.msra.mxu0 %v1397
    %2030 = vmatprep.subr.mxu0 %v1400
    %2031 = vmatpush1.msra.mxu0 %v1399
    %2032 = vmatprep.subr.mxu0 %v1402
    %2033 = vmatpush1.msra.mxu0 %v1401
    %2034 = vmatprep.subr.mxu0 %v1404
    %2035 = vmatpush1.msra.mxu0 %v1403
    %2036 = vmatprep.subr.mxu0 %v1406
    %2037 = vmatpush1.msra.mxu0 %v1405
    %2038 = vmatprep.subr.mxu0 %v1408
    %2039 = vmatpush1.msra.mxu0 %v1407
    %2040 = vmatprep.mubr.f32.mxu0 %v1531
    %2041 = vmatmul.mubr.f32.gmra.mrb[0].mxu0 %v1530
    %v2042 = vpop.f32.mrb[0].mxu0
    %v2043 = vadd.f32 %v1972, %v2042
    %v2044 = vpop.f32.mrb[0].mxu0
    %v2045 = vadd.f32 %v1974, %v2044
    %2046 = vdwg.mxu0
    %2047 = vmatprep.subr.mxu0 %v1410
    %2048 = vmatpush1.msra.mxu0 %v1409
    %2049 = vmatprep.subr.mxu0 %v1412
    %2050 = vmatpush1.msra.mxu0 %v1411
    %2051 = vmatprep.subr.mxu0 %v1414
    %2052 = vmatpush1.msra.mxu0 %v1413
    %2053 = vmatprep.subr.mxu0 %v1416
    %2054 = vmatpush1.msra.mxu0 %v1415
    %2055 = vmatprep.subr.mxu0 %v1418
    %2056 = vmatpush1.msra.mxu0 %v1417
    %2057 = vmatprep.subr.mxu0 %v1420
    %2058 = vmatpush1.msra.mxu0 %v1419
    %2059 = vmatprep.subr.mxu0 %v1422
    %2060 = vmatpush1.msra.mxu0 %v1421
    %2061 = vmatprep.subr.mxu0 %v1424
    %2062 = vmatpush1.msra.mxu0 %v1423
    %2063 = vmatprep.subr.mxu0 %v1426
    %2064 = vmatpush1.msra.mxu0 %v1425
    %2065 = vmatprep.subr.mxu0 %v1428
    %2066 = vmatpush1.msra.mxu0 %v1427
    %2067 = vmatprep.subr.mxu0 %v1430
    %2068 = vmatpush1.msra.mxu0 %v1429
    %2069 = vmatprep.subr.mxu0 %v1432
    %2070 = vmatpush1.msra.mxu0 %v1431
    %2071 = vmatprep.subr.mxu0 %v1434
    %2072 = vmatpush1.msra.mxu0 %v1433
    %2073 = vmatprep.subr.mxu0 %v1436
    %2074 = vmatpush1.msra.mxu0 %v1435
    %2075 = vmatprep.subr.mxu0 %v1438
    %2076 = vmatpush1.msra.mxu0 %v1437
    %2077 = vmatprep.subr.mxu0 %v1440
    %2078 = vmatpush1.msra.mxu0 %v1439
    %2079 = vmatprep.subr.mxu0 %v1442
    %2080 = vmatpush1.msra.mxu0 %v1441
    %2081 = vmatprep.subr.mxu0 %v1444
    %2082 = vmatpush1.msra.mxu0 %v1443
    %2083 = vmatprep.subr.mxu0 %v1446
    %2084 = vmatpush1.msra.mxu0 %v1445
    %2085 = vmatprep.subr.mxu0 %v1448
    %2086 = vmatpush1.msra.mxu0 %v1447
    %2087 = vmatprep.subr.mxu0 %v1450
    %2088 = vmatpush1.msra.mxu0 %v1449
    %2089 = vmatprep.subr.mxu0 %v1452
    %2090 = vmatpush1.msra.mxu0 %v1451
    %2091 = vmatprep.subr.mxu0 %v1454
    %2092 = vmatpush1.msra.mxu0 %v1453
    %2093 = vmatprep.subr.mxu0 %v1456
    %2094 = vmatpush1.msra.mxu0 %v1455
    %2095 = vmatprep.subr.mxu0 %v1458
    %2096 = vmatpush1.msra.mxu0 %v1457
    %2097 = vmatprep.subr.mxu0 %v1460
    %2098 = vmatpush1.msra.mxu0 %v1459
    %2099 = vmatprep.subr.mxu0 %v1462
    %2100 = vmatpush1.msra.mxu0 %v1461
    %2101 = vmatprep.subr.mxu0 %v1464
    %2102 = vmatpush1.msra.mxu0 %v1463
    %2103 = vmatprep.subr.mxu0 %v1466
    %2104 = vmatpush1.msra.mxu0 %v1465
    %2105 = vmatprep.subr.mxu0 %v1468
    %2106 = vmatpush1.msra.mxu0 %v1467
    %2107 = vmatprep.subr.mxu0 %v1470
    %2108 = vmatpush1.msra.mxu0 %v1469
    %2109 = vmatprep.subr.mxu0 %v1472
    %2110 = vmatpush1.msra.mxu0 %v1471
    %2111 = vmatprep.mubr.f32.mxu0 %v1533
    %2112 = vmatmul.mubr.f32.gmra.mrb[0].mxu0 %v1532
    %v2113 = vpop.f32.mrb[0].mxu0
    %v2114 = vadd.f32 %v2043, %v2113
    %v2115 = vpop.f32.mrb[0].mxu0
    %v2116 = vadd.f32 %v2045, %v2115
    %2117 = vdwg.mxu0
    %v2120 = vcombine.low %v2114, %v2116
    %v2122 = vunpack.c.l.s4 1983009808
    %v2123 = vunpack.c.0.s8 %v2122
    %v2124 = vlaneseq
    %v2125 = vshrl.u32 %v2124, 7
    %v2126 = vsub.s32 %v2123, %v2125
    %v2127 = vrot.slane %v2120, %v2126
    %2129 = vst [vmem:[#allocation9] sm:$0xf] %v2127
    // Predicated region
    $region30: #{tpu_custom_call.1} parent=1 // pred_check
      _
    $region31: #{tpu_custom_call.1} parent=1 // pred_check_branch
      %2131 = sbr.rel (0) target = $region33
    $region32: #{tpu_custom_call.1} parent=1 // pred_region
      %s2133 = ssub.s32 64, 64
      %2134 = vsyncadd [#allocation5], %s2133
      %s2136 = sshll.u32 [#allocation9], 4
      %s2137 = int_to_ptr.vmem [resolvable:$true] %s2136
      %2139 = dma.vmem_to_hbm [thread:$0]  %s2137, 64, %s4, [#allocation5]
    $region33: #{tpu_custom_call.1} parent=1 // pred_fallthru
      _
    // Predicated region
    $region34: #{tpu_custom_call.1} parent=1 // pred_check
      _
    $region35: #{tpu_custom_call.1} parent=1 // pred_check_branch
      %2141 = sbr.rel (0) target = $region37
    $region36: #{tpu_custom_call.1} parent=1 // pred_region
      %2142 = dma.done [#allocation5], 64
    $region37: #{tpu_custom_call.1} parent=1 // pred_fallthru
      _
    %2143 = vsyncpa [#allocation4], 1
    %2144 = vsyncpa [#allocation7], 1
    %2145 = vsyncpa [#allocation5], 1

</llo_original>
